<compile_context>
chip_gen: v6e
topology: v6e:2x2x1
jax: 0.10.0
libtpu: 0.0.40
codegen_flags: <defaults>
</compile_context>

<pallas_src>
import jax
import jax.numpy as jnp
from jax.experimental import pallas as pl
from jax.experimental.pallas import tpu as pltpu


# ---------------------------------------------------------------------------
# Pallas kernel
# ---------------------------------------------------------------------------
def peak2cell_kernel(
    x_ref,       # [TB, F]    bf16  sequence tile (same block across cell tiles)
    wenc_ref,    # [F, E]     bf16  encoder weight (VMEM-resident)
    benc_ref,    # [1, E]     f32
    wbot_ref,    # [E, D]     bf16  bottleneck weight (VMEM-resident)
    bbot_ref,    # [1, D]     f32
    whead_ref,   # [D, 2*TC]  bf16  fused [counts | logits] head weights, this cell tile
    bhead_ref,   # [1, 2*TC]  f32
    gains_ref,   # [TB, 4]    f32   packed (counts_k, counts_b, logits_k, logits_b)
    counts_ref,  # [TB, TC]   f32 out   NB total_count
    logits_ref,  # [TB, TC]   f32 out   NB logits
    z_ref,       # [TB, D]    bf16  scratch: bottleneck activations
):
    tc = counts_ref.shape[1]

    # Encoder + bottleneck: once per batch tile (cell axis is the inner axis).
    @pl.when(pl.program_id(1) == 0)
    def _():
        h = jnp.dot(x_ref[...], wenc_ref[...],
                    preferred_element_type=jnp.float32) + benc_ref[...]
        h = jnp.maximum(h, 0.0)
        z = jnp.dot(h.astype(jnp.bfloat16), wbot_ref[...],
                    preferred_element_type=jnp.float32) + bbot_ref[...]
        z_ref[...] = z.astype(jnp.bfloat16)

    # Fused decoder heads: one MXU matmul -> [TB, 2*TC] = [counts | logits].
    heads = jnp.dot(z_ref[...], whead_ref[...],
                    preferred_element_type=jnp.float32) + bhead_ref[...]
    seq2counts = heads[:, :tc]
    seq2logits = heads[:, tc:]

    # per-gene scale/shift (broadcast [TB,1] over the cell tile), f32 epilogue
    g = gains_ref[...]
    ck, cb = g[:, 0:1], g[:, 1:2]
    lk, lb = g[:, 2:3], g[:, 3:4]
    counts = ck * seq2counts + cb
    logits = lk * seq2logits + lb

    # numerically stable softplus, matches F.softplus(beta=1)
    counts_ref[...] = jnp.maximum(counts, 0.0) + jnp.log1p(jnp.exp(-jnp.abs(counts)))
    logits_ref[...] = logits


# ---------------------------------------------------------------------------
# Wrapper: padding / packing / embedding gather in JAX, compute in Pallas
# ---------------------------------------------------------------------------
def _pad_rows(a, rows):
    return jnp.zeros((rows,) + a.shape[1:], a.dtype).at[: a.shape[0]].set(a)


def _pad_cols(a, cols):
    return jnp.zeros(a.shape[:-1] + (cols,), a.dtype).at[..., : a.shape[-1]].set(a)


def peak2cell_forward(sequence, gene_ids, params, *, tb=128, tc=128):
    B, F = sequence.shape
    E = params["w_enc"].shape[1]
    D = params["w_bot"].shape[1]
    C = params["w_counts"].shape[1]

    Bp = pl.cdiv(B, tb) * tb
    Cp = pl.cdiv(C, tc) * tc
    nct = Cp // tc

    # ---- input / parameter prep (plain JAX glue) ---------------------------
    xp = _pad_rows(sequence.astype(jnp.bfloat16), Bp)

    # Embedding lookups packed into one [Bp, 4] array (single small DMA/tile).
    gains = jnp.concatenate(
        [params["counts_k"][gene_ids], params["counts_b"][gene_ids],
         params["logits_k"][gene_ids], params["logits_b"][gene_ids]],
        axis=1).astype(jnp.float32)
    gains = _pad_rows(gains, Bp)

    # Fuse the two heads: per cell tile, columns = [w_counts_tile | w_logits_tile].
    wc = _pad_cols(params["w_counts"].astype(jnp.bfloat16), Cp)
    wl = _pad_cols(params["w_logits"].astype(jnp.bfloat16), Cp)
    bc = _pad_cols(params["b_counts"].astype(jnp.float32), Cp)
    bl = _pad_cols(params["b_logits"].astype(jnp.float32), Cp)
    w_heads = jnp.concatenate(
        [wc.reshape(D, nct, tc), wl.reshape(D, nct, tc)], axis=2
    ).reshape(D, 2 * Cp)
    b_heads = jnp.concatenate(
        [bc.reshape(1, nct, tc), bl.reshape(1, nct, tc)], axis=2
    ).reshape(1, 2 * Cp)

    w_enc = params["w_enc"].astype(jnp.bfloat16)
    b_enc = params["b_enc"].astype(jnp.float32)
    w_bot = params["w_bot"].astype(jnp.bfloat16)
    b_bot = params["b_bot"].astype(jnp.float32)

    grid = (Bp // tb, Cp // tc)

    counts_p, logits_p = pl.pallas_call(
        peak2cell_kernel,
        out_shape=(
            jax.ShapeDtypeStruct((Bp, Cp), jnp.float32),
            jax.ShapeDtypeStruct((Bp, Cp), jnp.float32),
        ),
        grid_spec=pltpu.PrefetchScalarGridSpec(
            num_scalar_prefetch=0,
            grid=grid,
            in_specs=[
                pl.BlockSpec((tb, F), lambda b, c: (b, 0)),      # x (re-DMA only on new b)
                pl.BlockSpec((F, E), lambda b, c: (0, 0)),       # w_enc (resident)
                pl.BlockSpec((1, E), lambda b, c: (0, 0)),       # b_enc
                pl.BlockSpec((E, D), lambda b, c: (0, 0)),       # w_bot (resident)
                pl.BlockSpec((1, D), lambda b, c: (0, 0)),       # b_bot
                pl.BlockSpec((D, 2 * tc), lambda b, c: (0, c)),  # fused head weights
                pl.BlockSpec((1, 2 * tc), lambda b, c: (0, c)),  # fused head biases
                pl.BlockSpec((tb, 4), lambda b, c: (b, 0)),      # packed gene affine params
            ],
            out_specs=[
                pl.BlockSpec((tb, tc), lambda b, c: (b, c)),
                pl.BlockSpec((tb, tc), lambda b, c: (b, c)),
            ],
            scratch_shapes=[pltpu.VMEM((tb, D), jnp.bfloat16)],
        ),
        compiler_params=pltpu.CompilerParams(
            dimension_semantics=("parallel", "arbitrary"),
            vmem_limit_bytes=48 * 1024 * 1024,  # headroom below v7x's 64 MiB
        ),
    )(xp, w_enc, b_enc, w_bot, b_bot, w_heads, b_heads, gains)

    return counts_p[:B, :C], logits_p[:B, :C]


# Pure-JAX f32 reference for a correctness check.
def peak2cell_reference(sequence, gene_ids, params):
    h = jnp.maximum(sequence @ params["w_enc"] + params["b_enc"], 0.0)
    z = h @ params["w_bot"] + params["b_bot"]
    s2c = z @ params["w_counts"] + params["b_counts"]
    s2l = z @ params["w_logits"] + params["b_logits"]
    ck = params["counts_k"][gene_ids]
    cb = params["counts_b"][gene_ids]
    lk = params["logits_k"][gene_ids]
    lb = params["logits_b"][gene_ids]
    counts = jax.nn.softplus(ck * s2c + cb)
    logits = lk * s2l + lb
    return counts, logits


if __name__ == "__main__":
    # Small, deterministic shapes
    B = 8      # batch (peaks/sequences)
    F = 512    # flattened sequence features (e.g. 128 bp x 4 one-hot)
    E = 128    # encoder.out_dim
    D = 32     # bottleneck_size (module default)
    C = 200    # n_cells (not a multiple of 128 -> exercises padding path)
    G = 16     # number of genes

    key = jax.random.PRNGKey(0)
    keys = jax.random.split(key, 16)

    params = {
        "w_enc":    0.1 * jax.random.normal(keys[0], (F, E), jnp.float32),
        "b_enc":    0.1 * jax.random.normal(keys[1], (1, E), jnp.float32),
        "w_bot":    0.1 * jax.random.normal(keys[2], (E, D), jnp.float32),
        "b_bot":    0.1 * jax.random.normal(keys[3], (1, D), jnp.float32),
        "w_counts": 0.1 * jax.random.normal(keys[4], (D, C), jnp.float32),
        "b_counts": 0.1 * jax.random.normal(keys[5], (1, C), jnp.float32),
        "w_logits": 0.1 * jax.random.normal(keys[6], (D, C), jnp.float32),
        "b_logits": 0.1 * jax.random.normal(keys[7], (1, C), jnp.float32),
        # nn.Embedding(len(gene_ids), 1) tables
        "counts_k": jax.random.normal(keys[8],  (G, 1), jnp.float32),
        "counts_b": jax.random.normal(keys[9],  (G, 1), jnp.float32),
        "logits_k": jax.random.normal(keys[10], (G, 1), jnp.float32),
        "logits_b": jax.random.normal(keys[11], (G, 1), jnp.float32),
    }

    sequence = jax.random.normal(keys[12], (B, F), jnp.float32)
    gene_ids = jax.random.randint(keys[13], (B,), 0, G, jnp.int32)

    counts, logits = peak2cell_forward(sequence, gene_ids, params)
    counts = jax.block_until_ready(counts)
    logits = jax.block_until_ready(logits)

    ref_counts, ref_logits = peak2cell_reference(sequence, gene_ids, params)
    # bf16 matmul operands (f32 accumulation) -> compare with bf16-level tolerance
    assert jnp.allclose(counts, ref_counts, atol=5e-2, rtol=5e-2)
    assert jnp.allclose(logits, ref_logits, atol=5e-2, rtol=5e-2)
    assert counts.shape == (B, C) and logits.shape == (B, C)
    assert bool(jnp.all(counts > 0.0))  # NB total_count must be positive

    print("KERNEL_OK")
</pallas_src>

<mosaic_0001>
module attributes {stable_mosaic.version = 11 : i64} {
  func.func @peak2cell_kernel(%arg0: i32, %arg1: i32, %arg2: memref<128x512xbf16, #tpu.memory_space<vmem>>, %arg3: memref<512x128xbf16, #tpu.memory_space<vmem>>, %arg4: memref<1x128xf32, #tpu.memory_space<vmem>>, %arg5: memref<128x32xbf16, #tpu.memory_space<vmem>>, %arg6: memref<1x32xf32, #tpu.memory_space<vmem>>, %arg7: memref<32x256xbf16, #tpu.memory_space<vmem>>, %arg8: memref<1x256xf32, #tpu.memory_space<vmem>>, %arg9: memref<128x4xf32, #tpu.memory_space<vmem>>, %arg10: memref<128x128xf32, #tpu.memory_space<vmem>>, %arg11: memref<128x128xf32, #tpu.memory_space<vmem>>, %arg12: memref<128x32xbf16, #tpu.memory_space<vmem>>) attributes {dimension_semantics = [#tpu.dimension_semantics<parallel>, #tpu.dimension_semantics<arbitrary>], iteration_bounds = array<i64: 1, 2>, scalar_prefetch = 0 : i64, scratch_operands = 1 : i64, tpu.core_type = #tpu.core_type<tc>, window_params = [{transform_indices = @transform_0, window_bounds = array<i64: 128, 512>}, {pipeline_mode = #tpu.pipeline_mode<synchronous>, transform_indices = @transform_1, window_bounds = array<i64: 512, 128>}, {pipeline_mode = #tpu.pipeline_mode<synchronous>, transform_indices = @transform_2, window_bounds = array<i64: 1, 128>}, {pipeline_mode = #tpu.pipeline_mode<synchronous>, transform_indices = @transform_3, window_bounds = array<i64: 128, 32>}, {pipeline_mode = #tpu.pipeline_mode<synchronous>, transform_indices = @transform_4, window_bounds = array<i64: 1, 32>}, {transform_indices = @transform_5, window_bounds = array<i64: 32, 256>}, {transform_indices = @transform_6, window_bounds = array<i64: 1, 256>}, {transform_indices = @transform_7, window_bounds = array<i64: 128, 4>}, {transform_indices = @transform_8, window_bounds = array<i64: 128, 128>}, {transform_indices = @transform_9, window_bounds = array<i64: 128, 128>}]} {
    %c0_i32 = arith.constant 0 : i32
    %0 = arith.cmpi eq, %arg1, %c0_i32 : i32
    %1 = arith.extui %0 : i1 to i32
    %c0_i32_0 = arith.constant 0 : i32
    %2 = arith.cmpi ne, %1, %c0_i32_0 : i32
    scf.if %2 {
      %c0_14 = arith.constant 0 : index
      %c0_15 = arith.constant 0 : index
      %34 = vector.load %arg2[%c0_14, %c0_15] : memref<128x512xbf16, #tpu.memory_space<vmem>>, vector<128x512xbf16>
      %c0_16 = arith.constant 0 : index
      %c0_17 = arith.constant 0 : index
      %35 = vector.load %arg3[%c0_16, %c0_17] : memref<512x128xbf16, #tpu.memory_space<vmem>>, vector<512x128xbf16>
      %cst_18 = arith.constant dense<0.000000e+00> : vector<128x128xf32>
      %36 = tpu.matmul %34, %35, %cst_18 {dimension_numbers = #tpu.dot_dimension_numbers<[1], [0], [0], [1], [0, 0, 1, 1], [], []>} : vector<128x512xbf16>, vector<512x128xbf16>, vector<128x128xf32> -> vector<128x128xf32>
      %c0_19 = arith.constant 0 : index
      %c0_20 = arith.constant 0 : index
      %37 = vector.load %arg4[%c0_19, %c0_20] : memref<1x128xf32, #tpu.memory_space<vmem>>, vector<1x128xf32>
      %38 = vector.broadcast %37 : vector<1x128xf32> to vector<128x128xf32>
      %39 = arith.addf %36, %38 : vector<128x128xf32>
      %cst_21 = arith.constant 0.000000e+00 : f32
      %40 = vector.broadcast %cst_21 : f32 to vector<128x128xf32>
      %41 = arith.maximumf %39, %40 : vector<128x128xf32>
      %42 = arith.truncf %41 : vector<128x128xf32> to vector<128x128xbf16>
      %c0_22 = arith.constant 0 : index
      %c0_23 = arith.constant 0 : index
      %43 = vector.load %arg5[%c0_22, %c0_23] : memref<128x32xbf16, #tpu.memory_space<vmem>>, vector<128x32xbf16>
      %cst_24 = arith.constant dense<0.000000e+00> : vector<128x32xf32>
      %44 = tpu.matmul %42, %43, %cst_24 {dimension_numbers = #tpu.dot_dimension_numbers<[1], [0], [0], [1], [0, 0, 1, 1], [], []>} : vector<128x128xbf16>, vector<128x32xbf16>, vector<128x32xf32> -> vector<128x32xf32>
      %c0_25 = arith.constant 0 : index
      %c0_26 = arith.constant 0 : index
      %45 = vector.load %arg6[%c0_25, %c0_26] : memref<1x32xf32, #tpu.memory_space<vmem>>, vector<1x32xf32>
      %46 = vector.broadcast %45 : vector<1x32xf32> to vector<128x32xf32>
      %47 = arith.addf %44, %46 : vector<128x32xf32>
      %48 = arith.truncf %47 : vector<128x32xf32> to vector<128x32xbf16>
      %c0_27 = arith.constant 0 : index
      %c0_28 = arith.constant 0 : index
      %49 = vector.load %arg12[%c0_27, %c0_28] : memref<128x32xbf16, #tpu.memory_space<vmem>>, vector<128x32xbf16>
      tpu.vector_store %arg12[%c0_27, %c0_28], %48 {strides = array<i32>} : memref<128x32xbf16, #tpu.memory_space<vmem>>, vector<128x32xbf16>,
    } else {
    }
    %c0 = arith.constant 0 : index
    %c0_1 = arith.constant 0 : index
    %3 = vector.load %arg12[%c0, %c0_1] : memref<128x32xbf16, #tpu.memory_space<vmem>>, vector<128x32xbf16>
    %c0_2 = arith.constant 0 : index
    %c0_3 = arith.constant 0 : index
    %4 = vector.load %arg7[%c0_2, %c0_3] : memref<32x256xbf16, #tpu.memory_space<vmem>>, vector<32x256xbf16>
    %cst = arith.constant dense<0.000000e+00> : vector<128x256xf32>
    %5 = tpu.matmul %3, %4, %cst {dimension_numbers = #tpu.dot_dimension_numbers<[1], [0], [0], [1], [0, 0, 1, 1], [], []>} : vector<128x32xbf16>, vector<32x256xbf16>, vector<128x256xf32> -> vector<128x256xf32>
    %c0_4 = arith.constant 0 : index
    %c0_5 = arith.constant 0 : index
    %6 = vector.load %arg8[%c0_4, %c0_5] : memref<1x256xf32, #tpu.memory_space<vmem>>, vector<1x256xf32>
    %7 = vector.broadcast %6 : vector<1x256xf32> to vector<128x256xf32>
    %8 = arith.addf %5, %7 : vector<128x256xf32>
    %9 = vector.extract_strided_slice %8 {offsets = [0, 0], sizes = [128, 128], strides = [1, 1]} : vector<128x256xf32> to vector<128x128xf32>
    %10 = vector.extract_strided_slice %8 {offsets = [0, 128], sizes = [128, 128], strides = [1, 1]} : vector<128x256xf32> to vector<128x128xf32>
    %c0_6 = arith.constant 0 : index
    %c0_7 = arith.constant 0 : index
    %11 = vector.load %arg9[%c0_6, %c0_7] : memref<128x4xf32, #tpu.memory_space<vmem>>, vector<128x4xf32>
    %12 = vector.extract_strided_slice %11 {offsets = [0, 0], sizes = [128, 1], strides = [1, 1]} : vector<128x4xf32> to vector<128x1xf32>
    %13 = vector.extract_strided_slice %11 {offsets = [0, 1], sizes = [128, 1], strides = [1, 1]} : vector<128x4xf32> to vector<128x1xf32>
    %14 = vector.extract_strided_slice %11 {offsets = [0, 2], sizes = [128, 1], strides = [1, 1]} : vector<128x4xf32> to vector<128x1xf32>
    %15 = vector.extract_strided_slice %11 {offsets = [0, 3], sizes = [128, 1], strides = [1, 1]} : vector<128x4xf32> to vector<128x1xf32>
    %16 = vector.broadcast %12 : vector<128x1xf32> to vector<128x128xf32>
    %17 = arith.mulf %16, %9 : vector<128x128xf32>
    %18 = vector.broadcast %13 : vector<128x1xf32> to vector<128x128xf32>
    %19 = arith.addf %17, %18 : vector<128x128xf32>
    %20 = vector.broadcast %14 : vector<128x1xf32> to vector<128x128xf32>
    %21 = arith.mulf %20, %10 : vector<128x128xf32>
    %22 = vector.broadcast %15 : vector<128x1xf32> to vector<128x128xf32>
    %23 = arith.addf %21, %22 : vector<128x128xf32>
    %cst_8 = arith.constant 0.000000e+00 : f32
    %24 = vector.broadcast %cst_8 : f32 to vector<128x128xf32>
    %25 = arith.maximumf %19, %24 : vector<128x128xf32>
    %26 = math.absf %19 : vector<128x128xf32>
    %cst_9 = arith.constant 0.000000e+00 : f32
    %27 = vector.broadcast %cst_9 : f32 to vector<128x128xf32>
    %28 = arith.subf %27, %26 : vector<128x128xf32>
    %29 = math.exp %28 : vector<128x128xf32>
    %30 = math.log1p %29 : vector<128x128xf32>
    %31 = arith.addf %25, %30 : vector<128x128xf32>
    %c0_10 = arith.constant 0 : index
    %c0_11 = arith.constant 0 : index
    %32 = vector.load %arg10[%c0_10, %c0_11] : memref<128x128xf32, #tpu.memory_space<vmem>>, vector<128x128xf32>
    tpu.vector_store %arg10[%c0_10, %c0_11], %31 {strides = array<i32>} : memref<128x128xf32, #tpu.memory_space<vmem>>, vector<128x128xf32>,
    %c0_12 = arith.constant 0 : index
    %c0_13 = arith.constant 0 : index
    %33 = vector.load %arg11[%c0_12, %c0_13] : memref<128x128xf32, #tpu.memory_space<vmem>>, vector<128x128xf32>
    tpu.vector_store %arg11[%c0_12, %c0_13], %23 {strides = array<i32>} : memref<128x128xf32, #tpu.memory_space<vmem>>, vector<128x128xf32>,
    return
  }
  func.func @transform_0(%arg0: i32, %arg1: i32) -> (i32, i32) {
    %c0_i32 = arith.constant 0 : i32
    %c0_i32_0 = arith.constant 0 : i32
    return %arg0, %c0_i32 : i32, i32
  }
  func.func @transform_1(%arg0: i32, %arg1: i32) -> (i32, i32) {
    %c0_i32 = arith.constant 0 : i32
    %c0_i32_0 = arith.constant 0 : i32
    %c0_i32_1 = arith.constant 0 : i32
    return %c0_i32, %c0_i32_0 : i32, i32
  }
  func.func @transform_2(%arg0: i32, %arg1: i32) -> (i32, i32) {
    %c0_i32 = arith.constant 0 : i32
    %c0_i32_0 = arith.constant 0 : i32
    %c0_i32_1 = arith.constant 0 : i32
    return %c0_i32, %c0_i32_0 : i32, i32
  }
  func.func @transform_3(%arg0: i32, %arg1: i32) -> (i32, i32) {
    %c0_i32 = arith.constant 0 : i32
    %c0_i32_0 = arith.constant 0 : i32
    %c0_i32_1 = arith.constant 0 : i32
    return %c0_i32, %c0_i32_0 : i32, i32
  }
  func.func @transform_4(%arg0: i32, %arg1: i32) -> (i32, i32) {
    %c0_i32 = arith.constant 0 : i32
    %c0_i32_0 = arith.constant 0 : i32
    %c0_i32_1 = arith.constant 0 : i32
    return %c0_i32, %c0_i32_0 : i32, i32
  }
  func.func @transform_5(%arg0: i32, %arg1: i32) -> (i32, i32) {
    %c0_i32 = arith.constant 0 : i32
    %c0_i32_0 = arith.constant 0 : i32
    return %c0_i32, %arg1 : i32, i32
  }
  func.func @transform_6(%arg0: i32, %arg1: i32) -> (i32, i32) {
    %c0_i32 = arith.constant 0 : i32
    %c0_i32_0 = arith.constant 0 : i32
    return %c0_i32, %arg1 : i32, i32
  }
  func.func @transform_7(%arg0: i32, %arg1: i32) -> (i32, i32) {
    %c0_i32 = arith.constant 0 : i32
    %c0_i32_0 = arith.constant 0 : i32
    return %arg0, %c0_i32 : i32, i32
  }
  func.func @transform_8(%arg0: i32, %arg1: i32) -> (i32, i32) {
    %c0_i32 = arith.constant 0 : i32
    return %arg0, %arg1 : i32, i32
  }
  func.func @transform_9(%arg0: i32, %arg1: i32) -> (i32, i32) {
    %c0_i32 = arith.constant 0 : i32
    return %arg0, %arg1 : i32, i32
  }
}

</mosaic_0001>

<llo_original>
// kernel: tpu_custom_call.1
$region0: #{tpu_custom_call.1}
  #allocation0 [shape = 'u32[]', space=smem, size = 0x4, offset = 0x4, fixed_abs, tag = 'smem constant byte address 0x4 - core index']
  #allocation1 [shape = 'u32[144,128]{1,0:T(1,128)}', space=vmem, size = 0x12000, scoped, tag = 'internal scratch']
  #allocation2 [shape = 'bf16[128,32]{1,0:T(8,128)(2,1)}', space=vmem, size = 0x8000, scoped, tag = 'scratch operand']
  %s0 = inlined_call_operand.hbm [shape: bf16[128,512], index: 0, kind: input, shape index: {}]
  %s1 = inlined_call_operand.hbm [shape: bf16[512,128], index: 1, kind: input, shape index: {}]
  %s2 = inlined_call_operand.vmem [shape: f32[1,128], index: 2, kind: input, shape index: {}]
  %s3 = inlined_call_operand.vmem [shape: bf16[128,32], index: 3, kind: input, shape index: {}]
  %s4 = inlined_call_operand.vmem [shape: f32[1,32], index: 4, kind: input, shape index: {}]
  %s5 = inlined_call_operand.vmem [shape: bf16[32,512], index: 5, kind: input, shape index: {}]
  %s6 = inlined_call_operand.vmem [shape: f32[1,512], index: 6, kind: input, shape index: {}]
  %s7 = inlined_call_operand.vmem [shape: f32[128,4], index: 7, kind: input, shape index: {}]
  %s8 = inlined_call_operand.hbm [shape: f32[128,256], index: 8, kind: output, shape index: {0}]
  %s9 = inlined_call_operand.hbm [shape: f32[128,256], index: 9, kind: output, shape index: {1}]
  %10 = xla_tuple %s8, %s9
  %s11 = sld [smem:[#allocation0]]
  $region123: #{tpu_custom_call.1} parent=0
    _
  %s13 = ssub.s32 1, %s11
  %s14 = scalar_select 0, %s13, %s11
  $region1: #{tpu_custom_call.1} parent=0
    #allocation3 [shape = 'u8[131072]{0}', space=vmem, size = 0x20000, scoped, tag = 'input window, operand 0, single buffered']
    #allocation4 [shape = 's32[2]{0}', space=sflag, size = 0x8, scoped, tag = 'scoped memory for tpu_custom_call.1']
    #allocation5 [shape = 's32[2]{0}', space=sflag, size = 0x8, scoped, tag = 'scoped memory for tpu_custom_call.1']
    #allocation6 [shape = 'u8[131072]{0}', space=vmem, size = 0x20000, scoped, tag = 'input window, operand 1, single buffered']
    #allocation7 [shape = 's32[1]{0}', space=sflag, size = 0x4, scoped, tag = 'scoped memory for tpu_custom_call.1']
    #allocation8 [shape = 'u8[32768]{0}', space=vmem, size = 0x8000, scoped, tag = 'input window, operand 5']
    #allocation9 [shape = 'u8[131072]{0}', space=vmem, size = 0x20000, scoped, tag = 'output window, operand 0']
    #allocation10 [shape = 'u8[131072]{0}', space=vmem, size = 0x20000, scoped, tag = 'output window, operand 1']
    #allocation11 [shape = 's32[2]{0}', space=sflag, size = 0x8, scoped, tag = 'scoped memory for tpu_custom_call.1']
    %15 = vsyncpa [#allocation4], 0
    %16 = vsyncpa [#allocation7], 0
    %17 = vsyncpa [#allocation5], 0
    %s18 = scalar_lea.sflag [#allocation5], 1
    %19 = vsyncpa %s18, 0
    %20 = vsyncpa [#allocation11], 0
    %s21 = scalar_lea.sflag [#allocation11], 1
    %22 = vsyncpa %s21, 0
    loop: start=0, step=1, limit=4
    $region2: #{tpu_custom_call.1} parent=1 // loop_pre_header
      _
    $region3: #{tpu_custom_call.1} parent=1 // loop_header
      %s24 = sphi 0, %s28
      %p25 = scmp.ge.s32.totalorder %s24, 4
      %s31 = sphi 0, %s43
      %s32 = sphi 0, %s39
      %s33 = sphi 0, %s31
      %s34 = sphi 0, %s32
      %s35 = sphi 0, %s33
      %s36 = sphi 0, %s34
      %s46 = sphi 0, %s48
      %s49 = sphi 0, %s46
      %s50 = sphi 0, %s49
      %s66 = sphi 0, %s50
      %s70 = sphi 0, %s70
      %s72 = sphi 0, %s70
      %s73 = sphi 0, %s72
      %s87 = sphi 0, %s73
      %s91 = sphi 0, %s91
      %s93 = sphi 0, %s91
      %s94 = sphi 0, %s93
      %s108 = sphi 0, %s94
      %s112 = sphi 0, %s112
      %s114 = sphi 0, %s112
      %s115 = sphi 0, %s114
      %s129 = sphi 0, %s115
      %s133 = sphi 0, %s133
      %s135 = sphi 0, %s133
      %s136 = sphi 0, %s135
      %s150 = sphi 0, %s136
      %s156 = sphi 0, %s158
      %s159 = sphi 0, %s156
      %s160 = sphi 0, %s159
      %s176 = sphi 0, %s160
      %s182 = sphi 0, %s184
      %s185 = sphi 0, %s182
      %s186 = sphi 0, %s185
      %s202 = sphi 0, %s186
      %s208 = sphi 0, %s210
      %s211 = sphi 0, %s208
      %s212 = sphi 0, %s211
      %s228 = sphi 0, %s212
      %s236 = sphi 0, %s238
      %s239 = sphi 0, %s236
      %s240 = sphi 0, %s239
      %s256 = sphi 0, %s240
      %s264 = sphi 0, %s266
      %s267 = sphi 0, %s264
      %s268 = sphi 0, %s267
      %s284 = sphi 0, %s268
    $region4: #{tpu_custom_call.1} parent=1 // loop_header_branch
      %27 = sbr.rel (%p25) target = $region8
    $region5: #{tpu_custom_call.1} parent=1 // loop_body
      %s29 = ssub.s32 %s24, 1
      %s30 = ssub.s32 %s24, 2
      %s37 = sadd.s32 1, %s32
      %p38 = scmp.ge.s32.totalorder %s37, 2
      %s39 = scalar_select %p38, 0, %s37
      %s40 = sadd.s32 1, %s31
      %s41 = scalar_select %p38, %s40, %s31
      %p42 = scmp.ge.s32.totalorder %s41, 1
      %s43 = scalar_select %p42, 0, %s41
      %s44 = ssub.s32 %s31, %s43
      %p45 = scmp.eq.s32.totalorder %s44, 0
      %s47 = sadd.s32 %s46, 1
      %s48 = scalar_select %p45, %s46, %s47
      %p51 = pneg %p45
      %p52 = scmp.eq.s32.totalorder %s24, 1
      %p53 = por %p51, %p52
      %p54 = scmp.ne.s32.totalorder %s46, %s49
      %p55 = scmp.eq.s32.totalorder %s24, 0
      %p56 = por %p54, %p55
      %p57 = scmp.ne.s32.totalorder %s46, %s49
      %p58 = scmp.eq.s32.totalorder %s29, 1
      %p59 = por %p57, %p58
      %p60 = scmp.ne.s32.totalorder %s49, %s50
      %p61 = scmp.eq.s32.totalorder %s29, 0
      %p62 = por %p60, %p61
      %p63 = scmp.ne.s32.totalorder %s49, %s50
      %p64 = scmp.eq.s32.totalorder %s30, 1
      %p65 = por %p63, %p64
      %p67 = scmp.ne.s32.totalorder %s50, %s66
      %p68 = scmp.eq.s32.totalorder %s30, 0
      %p69 = por %p67, %p68
      %s71 = sadd.s32 %s70, 1
      %p74 = scmp.eq.s32.totalorder %s24, 1
      %p75 = scmp.ne.s32.totalorder %s70, %s72
      %p76 = scmp.eq.s32.totalorder %s24, 0
      %p77 = por %p75, %p76
      %p78 = scmp.ne.s32.totalorder %s70, %s72
      %p79 = scmp.eq.s32.totalorder %s29, 1
      %p80 = por %p78, %p79
      %p81 = scmp.ne.s32.totalorder %s72, %s73
      %p82 = scmp.eq.s32.totalorder %s29, 0
      %p83 = por %p81, %p82
      %p84 = scmp.ne.s32.totalorder %s72, %s73
      %p85 = scmp.eq.s32.totalorder %s30, 1
      %p86 = por %p84, %p85
      %p88 = scmp.ne.s32.totalorder %s73, %s87
      %p89 = scmp.eq.s32.totalorder %s30, 0
      %p90 = por %p88, %p89
      %s92 = sadd.s32 %s91, 1
      %p95 = scmp.eq.s32.totalorder %s24, 1
      %p96 = scmp.ne.s32.totalorder %s91, %s93
      %p97 = scmp.eq.s32.totalorder %s24, 0
      %p98 = por %p96, %p97
      %p99 = scmp.ne.s32.totalorder %s91, %s93
      %p100 = scmp.eq.s32.totalorder %s29, 1
      %p101 = por %p99, %p100
      %p102 = scmp.ne.s32.totalorder %s93, %s94
      %p103 = scmp.eq.s32.totalorder %s29, 0
      %p104 = por %p102, %p103
      %p105 = scmp.ne.s32.totalorder %s93, %s94
      %p106 = scmp.eq.s32.totalorder %s30, 1
      %p107 = por %p105, %p106
      %p109 = scmp.ne.s32.totalorder %s94, %s108
      %p110 = scmp.eq.s32.totalorder %s30, 0
      %p111 = por %p109, %p110
      %s113 = sadd.s32 %s112, 1
      %p116 = scmp.eq.s32.totalorder %s24, 1
      %p117 = scmp.ne.s32.totalorder %s112, %s114
      %p118 = scmp.eq.s32.totalorder %s24, 0
      %p119 = por %p117, %p118
      %p120 = scmp.ne.s32.totalorder %s112, %s114
      %p121 = scmp.eq.s32.totalorder %s29, 1
      %p122 = por %p120, %p121
      %p123 = scmp.ne.s32.totalorder %s114, %s115
      %p124 = scmp.eq.s32.totalorder %s29, 0
      %p125 = por %p123, %p124
      %p126 = scmp.ne.s32.totalorder %s114, %s115
      %p127 = scmp.eq.s32.totalorder %s30, 1
      %p128 = por %p126, %p127
      %p130 = scmp.ne.s32.totalorder %s115, %s129
      %p131 = scmp.eq.s32.totalorder %s30, 0
      %p132 = por %p130, %p131
      %s134 = sadd.s32 %s133, 1
      %p137 = scmp.eq.s32.totalorder %s24, 1
      %p138 = scmp.ne.s32.totalorder %s133, %s135
      %p139 = scmp.eq.s32.totalorder %s24, 0
      %p140 = por %p138, %p139
      %p141 = scmp.ne.s32.totalorder %s133, %s135
      %p142 = scmp.eq.s32.totalorder %s29, 1
      %p143 = por %p141, %p142
      %p144 = scmp.ne.s32.totalorder %s135, %s136
      %p145 = scmp.eq.s32.totalorder %s29, 0
      %p146 = por %p144, %p145
      %p147 = scmp.ne.s32.totalorder %s135, %s136
      %p148 = scmp.eq.s32.totalorder %s30, 1
      %p149 = por %p147, %p148
      %p151 = scmp.ne.s32.totalorder %s136, %s150
      %p152 = scmp.eq.s32.totalorder %s30, 0
      %p153 = por %p151, %p152
      %s154 = ssub.s32 %s32, %s39
      %p155 = scmp.eq.s32.totalorder %s154, 0
      %s157 = sadd.s32 %s156, 1
      %s158 = scalar_select %p155, %s156, %s157
      %p161 = pneg %p155
      %p162 = scmp.eq.s32.totalorder %s24, 1
      %p163 = por %p161, %p162
      %p164 = scmp.ne.s32.totalorder %s156, %s159
      %p165 = scmp.eq.s32.totalorder %s24, 0
      %p166 = por %p164, %p165
      %p167 = scmp.ne.s32.totalorder %s156, %s159
      %p168 = scmp.eq.s32.totalorder %s29, 1
      %p169 = por %p167, %p168
      %p170 = scmp.ne.s32.totalorder %s159, %s160
      %p171 = scmp.eq.s32.totalorder %s29, 0
      %p172 = por %p170, %p171
      %p173 = scmp.ne.s32.totalorder %s159, %s160
      %p174 = scmp.eq.s32.totalorder %s30, 1
      %p175 = por %p173, %p174
      %p177 = scmp.ne.s32.totalorder %s160, %s176
      %p178 = scmp.eq.s32.totalorder %s30, 0
      %p179 = por %p177, %p178
      %s180 = ssub.s32 %s32, %s39
      %p181 = scmp.eq.s32.totalorder %s180, 0
      %s183 = sadd.s32 %s182, 1
      %s184 = scalar_select %p181, %s182, %s183
      %p187 = pneg %p181
      %p188 = scmp.eq.s32.totalorder %s24, 1
      %p189 = por %p187, %p188
      %p190 = scmp.ne.s32.totalorder %s182, %s185
      %p191 = scmp.eq.s32.totalorder %s24, 0
      %p192 = por %p190, %p191
      %p193 = scmp.ne.s32.totalorder %s182, %s185
      %p194 = scmp.eq.s32.totalorder %s29, 1
      %p195 = por %p193, %p194
      %p196 = scmp.ne.s32.totalorder %s185, %s186
      %p197 = scmp.eq.s32.totalorder %s29, 0
      %p198 = por %p196, %p197
      %p199 = scmp.ne.s32.totalorder %s185, %s186
      %p200 = scmp.eq.s32.totalorder %s30, 1
      %p201 = por %p199, %p200
      %p203 = scmp.ne.s32.totalorder %s186, %s202
      %p204 = scmp.eq.s32.totalorder %s30, 0
      %p205 = por %p203, %p204
      %s206 = ssub.s32 %s31, %s43
      %p207 = scmp.eq.s32.totalorder %s206, 0
      %s209 = sadd.s32 %s208, 1
      %s210 = scalar_select %p207, %s208, %s209
      %p213 = pneg %p207
      %p214 = scmp.eq.s32.totalorder %s24, 1
      %p215 = por %p213, %p214
      %p216 = scmp.ne.s32.totalorder %s208, %s211
      %p217 = scmp.eq.s32.totalorder %s24, 0
      %p218 = por %p216, %p217
      %p219 = scmp.ne.s32.totalorder %s208, %s211
      %p220 = scmp.eq.s32.totalorder %s29, 1
      %p221 = por %p219, %p220
      %p222 = scmp.ne.s32.totalorder %s211, %s212
      %p223 = scmp.eq.s32.totalorder %s29, 0
      %p224 = por %p222, %p223
      %p225 = scmp.ne.s32.totalorder %s211, %s212
      %p226 = scmp.eq.s32.totalorder %s30, 1
      %p227 = por %p225, %p226
      %p229 = scmp.ne.s32.totalorder %s212, %s228
      %p230 = scmp.eq.s32.totalorder %s30, 0
      %p231 = por %p229, %p230
      %s232 = ssub.s32 %s31, %s43
      %s233 = ssub.s32 %s32, %s39
      %s234 = sor.u32 %s232, %s233
      %p235 = scmp.eq.s32.totalorder %s234, 0
      %s237 = sadd.s32 %s236, 1
      %s238 = scalar_select %p235, %s236, %s237
      %p241 = pneg %p235
      %p242 = scmp.eq.s32.totalorder %s24, 1
      %p243 = por %p241, %p242
      %p244 = scmp.ne.s32.totalorder %s236, %s239
      %p245 = scmp.eq.s32.totalorder %s24, 0
      %p246 = por %p244, %p245
      %p247 = scmp.ne.s32.totalorder %s236, %s239
      %p248 = scmp.eq.s32.totalorder %s29, 1
      %p249 = por %p247, %p248
      %p250 = scmp.ne.s32.totalorder %s239, %s240
      %p251 = scmp.eq.s32.totalorder %s29, 0
      %p252 = por %p250, %p251
      %p253 = scmp.ne.s32.totalorder %s239, %s240
      %p254 = scmp.eq.s32.totalorder %s30, 1
      %p255 = por %p253, %p254
      %p257 = scmp.ne.s32.totalorder %s240, %s256
      %p258 = scmp.eq.s32.totalorder %s30, 0
      %p259 = por %p257, %p258
      %s260 = ssub.s32 %s31, %s43
      %s261 = ssub.s32 %s32, %s39
      %s262 = sor.u32 %s260, %s261
      %p263 = scmp.eq.s32.totalorder %s262, 0
      %s265 = sadd.s32 %s264, 1
      %s266 = scalar_select %p263, %s264, %s265
      %p269 = pneg %p263
      %p270 = scmp.eq.s32.totalorder %s24, 1
      %p271 = por %p269, %p270
      %p272 = scmp.ne.s32.totalorder %s264, %s267
      %p273 = scmp.eq.s32.totalorder %s24, 0
      %p274 = por %p272, %p273
      %p275 = scmp.ne.s32.totalorder %s264, %s267
      %p276 = scmp.eq.s32.totalorder %s29, 1
      %p277 = por %p275, %p276
      %p278 = scmp.ne.s32.totalorder %s267, %s268
      %p279 = scmp.eq.s32.totalorder %s29, 0
      %p280 = por %p278, %p279
      %p281 = scmp.ne.s32.totalorder %s267, %s268
      %p282 = scmp.eq.s32.totalorder %s30, 1
      %p283 = por %p281, %p282
      %p285 = scmp.ne.s32.totalorder %s268, %s284
      %p286 = scmp.eq.s32.totalorder %s30, 0
      %p287 = por %p285, %p286
      %p288 = scmp.le.s32.totalorder 1, %s24
      %p289 = scmp.lt.s32.totalorder %s24, 3
      %p290 = pnand %p288, %p289
      %p291 = pneg %p290
      // Predicated region
      $region9: #{tpu_custom_call.1} parent=5 // pred_check
        _
      $region10: #{tpu_custom_call.1} parent=5 // pred_check_branch
        %293 = sbr.rel (%p290) target = $region12
      $region11: #{tpu_custom_call.1} parent=5 // pred_region
        %s294 = ssub.s32 %s24, 1
        // Predicated region
        $region13: #{tpu_custom_call.1} parent=11 // pred_check
          %p295 = pneg %p62
        $region14: #{tpu_custom_call.1} parent=11 // pred_check_branch
          %297 = sbr.rel (%p295) target = $region16
        $region15: #{tpu_custom_call.1} parent=11 // pred_region
          %s298 = smul.u32 16, %s33
          %s300 = ssub.s32 4096, 4096
          %301 = vsyncadd [#allocation4], %s300
          %s302 = smul.addr %s298, 4
          %s303 = smul.addr %s302, 64
          %s304 = scalar_lea.hbm %s0, %s303
          %s305 = sshll.u32 [#allocation3], 4
          %s306 = int_to_ptr.vmem [resolvable:$true] %s305
          %311 = dma.hbm_to_vmem [thread:$0]  %s304, 4096, %s306, [#allocation4], 256, 256, 16
        $region16: #{tpu_custom_call.1} parent=11 // pred_fallthru
          _
        // Predicated region
        $region17: #{tpu_custom_call.1} parent=11 // pred_check
          %p312 = pneg %p83
        $region18: #{tpu_custom_call.1} parent=11 // pred_check_branch
          %314 = sbr.rel (%p312) target = $region20
        $region19: #{tpu_custom_call.1} parent=11 // pred_region
          %s316 = ssub.s32 4096, 4096
          %317 = vsyncadd [#allocation7], %s316
          %s318 = sshll.u32 [#allocation6], 4
          %s319 = int_to_ptr.vmem [resolvable:$true] %s318
          %324 = dma.hbm_to_vmem [thread:$0]  %s1, 4096, %s319, [#allocation7], 64, 64, 4
        $region20: #{tpu_custom_call.1} parent=11 // pred_fallthru
          _
        // Predicated region
        $region21: #{tpu_custom_call.1} parent=11 // pred_check
          %p325 = pneg %p104
        $region22: #{tpu_custom_call.1} parent=11 // pred_check_branch
          %327 = sbr.rel (%p325) target = $region24
        $region23: #{tpu_custom_call.1} parent=11 // pred_region
          _
        $region24: #{tpu_custom_call.1} parent=11 // pred_fallthru
          _
        // Predicated region
        $region25: #{tpu_custom_call.1} parent=11 // pred_check
          %p328 = pneg %p125
        $region26: #{tpu_custom_call.1} parent=11 // pred_check_branch
          %330 = sbr.rel (%p328) target = $region28
        $region27: #{tpu_custom_call.1} parent=11 // pred_region
          _
        $region28: #{tpu_custom_call.1} parent=11 // pred_fallthru
          _
        // Predicated region
        $region29: #{tpu_custom_call.1} parent=11 // pred_check
          %p331 = pneg %p146
        $region30: #{tpu_custom_call.1} parent=11 // pred_check_branch
          %333 = sbr.rel (%p331) target = $region32
        $region31: #{tpu_custom_call.1} parent=11 // pred_region
          _
        $region32: #{tpu_custom_call.1} parent=11 // pred_fallthru
          _
        // Predicated region
        $region33: #{tpu_custom_call.1} parent=11 // pred_check
          %p334 = pneg %p224
        $region34: #{tpu_custom_call.1} parent=11 // pred_check_branch
          %336 = sbr.rel (%p334) target = $region36
        $region35: #{tpu_custom_call.1} parent=11 // pred_region
          %s337 = smul.u32 16, %s33
          %p338 = scmp.lt.s32.totalorder %s337, 15
          %s339 = scalar_select %p338, %s337, 15
          %s340 = smul.addr %s339, 8
          %s341 = scalar_lea.vmem %s7, %s340
          %s342 = smul.u32 16, %s33
        $region36: #{tpu_custom_call.1} parent=11 // pred_fallthru
          _
      $region12: #{tpu_custom_call.1} parent=5 // pred_fallthru
        _
      %p343 = scmp.lt.s32.totalorder %s24, 2
      // Predicated region
      $region37: #{tpu_custom_call.1} parent=5 // pred_check
        %p344 = pneg %p343
      $region38: #{tpu_custom_call.1} parent=5 // pred_check_branch
        %346 = sbr.rel (%p344) target = $region40
      $region39: #{tpu_custom_call.1} parent=5 // pred_region
        // Predicated region
        $region41: #{tpu_custom_call.1} parent=39 // pred_check
          %p347 = pneg %p166
        $region42: #{tpu_custom_call.1} parent=39 // pred_check_branch
          %349 = sbr.rel (%p347) target = $region44
        $region43: #{tpu_custom_call.1} parent=39 // pred_region
          %s350 = sand.u32 %s156, 1
          %s351 = sand.u32 %s156, 1
          %s352 = smul.addr %s351, 32
          %s353 = scalar_lea.vmem [#allocation8], %s352
          %s354 = smul.u32 2, %s32
          %s355 = smul.addr %s354, 4
          %s356 = scalar_lea.vmem %s5, %s355
          // Predicated region
          $region45: #{tpu_custom_call.1} parent=43 // pred_check
            _
          $region46: #{tpu_custom_call.1} parent=43 // pred_check_branch
            %358 = sbr.rel (0) target = $region48
          $region47: #{tpu_custom_call.1} parent=43 // pred_region
            // Predicated region
            $region49: #{tpu_custom_call.1} parent=47 // pred_check
              _
            $region50: #{tpu_custom_call.1} parent=47 // pred_check_branch
              %360 = sbr.rel (0) target = $region52
            $region51: #{tpu_custom_call.1} parent=47 // pred_region
              // Predicated region
              $region64: #{tpu_custom_call.1} parent=51 // pred_check
                _
              $region65: #{tpu_custom_call.1} parent=51 // pred_check_branch
                %382 = sbr.rel (0) target = $region67
              $region66: #{tpu_custom_call.1} parent=51 // pred_region
                loop: start=0, step=1, limit=1
                $region68: #{tpu_custom_call.1} parent=66 // loop_pre_header
                  _
                $region69: #{tpu_custom_call.1} parent=66 // loop_header
                  %s384 = sphi 0, %s388
                  %p385 = scmp.ge.s32.totalorder %s384, 1
                  %s389 = sphi %s356, %s356
                  %s390 = sphi %s353, %s353
                $region70: #{tpu_custom_call.1} parent=66 // loop_header_branch
                  %387 = sbr.rel (%p385) target = $region74
                $region71: #{tpu_custom_call.1} parent=66 // loop_body
                  %v391 = vld [vmem:[%s389] sm:$0xff]
                  %392 = vst [vmem:[%s390] sm:$0xff] %v391
                  %v393 = vld [vmem:[%s389 + $0x10] sm:$0xff]
                  %394 = vst [vmem:[%s390 + $0x8] sm:$0xff] %v393
                  %v395 = vld [vmem:[%s389 + $0x20] sm:$0xff]
                  %396 = vst [vmem:[%s390 + $0x10] sm:$0xff] %v395
                  %v397 = vld [vmem:[%s389 + $0x30] sm:$0xff]
                  %398 = vst [vmem:[%s390 + $0x18] sm:$0xff] %v397
                $region72: #{tpu_custom_call.1} parent=66 // loop_footer
                  %s388 = sadd.s32 1, %s384
                $region73: #{tpu_custom_call.1} parent=66 // loop_footer_branch
                  %383 = sbr.rel target = $region69
                $region74: #{tpu_custom_call.1} parent=66 // loop_exit
                  _
              $region67: #{tpu_custom_call.1} parent=51 // pred_fallthru
                _
              // Predicated region
              $region75: #{tpu_custom_call.1} parent=51 // pred_check
                _
              $region76: #{tpu_custom_call.1} parent=51 // pred_check_branch
                %400 = sbr.rel target = $region78
              $region77: #{tpu_custom_call.1} parent=51 // pred_region
                _
              $region78: #{tpu_custom_call.1} parent=51 // pred_fallthru
                _
            $region52: #{tpu_custom_call.1} parent=47 // pred_fallthru
              _
            // Predicated region
            $region53: #{tpu_custom_call.1} parent=47 // pred_check
              _
            $region54: #{tpu_custom_call.1} parent=47 // pred_check_branch
              %362 = sbr.rel target = $region56
            $region55: #{tpu_custom_call.1} parent=47 // pred_region
              %s364 = ssub.s32 256, 1
              loop: start=0, step=1, limit=1
              $region57: #{tpu_custom_call.1} parent=55 // loop_pre_header
                _
              $region58: #{tpu_custom_call.1} parent=55 // loop_header
                %s366 = sphi 0, %s370
                %p367 = scmp.ge.s32.totalorder %s366, 1
                %s371 = sphi %s356, %s356
                %s372 = sphi %s353, %s353
              $region59: #{tpu_custom_call.1} parent=55 // loop_header_branch
                %369 = sbr.rel (%p367) target = $region63
              $region60: #{tpu_custom_call.1} parent=55 // loop_body
                %v373 = vld [vmem:[%s371] sm:%s364]
                %374 = vst [vmem:[%s372] sm:%s364] %v373
                %v375 = vld [vmem:[%s371 + $0x10] sm:%s364]
                %376 = vst [vmem:[%s372 + $0x8] sm:%s364] %v375
                %v377 = vld [vmem:[%s371 + $0x20] sm:%s364]
                %378 = vst [vmem:[%s372 + $0x10] sm:%s364] %v377
                %v379 = vld [vmem:[%s371 + $0x30] sm:%s364]
                %380 = vst [vmem:[%s372 + $0x18] sm:%s364] %v379
              $region61: #{tpu_custom_call.1} parent=55 // loop_footer
                %s370 = sadd.s32 1, %s366
              $region62: #{tpu_custom_call.1} parent=55 // loop_footer_branch
                %365 = sbr.rel target = $region58
              $region63: #{tpu_custom_call.1} parent=55 // loop_exit
                _
            $region56: #{tpu_custom_call.1} parent=47 // pred_fallthru
              _
          $region48: #{tpu_custom_call.1} parent=43 // pred_fallthru
            _
          %401 = vnop
        $region44: #{tpu_custom_call.1} parent=39 // pred_fallthru
          _
        // Predicated region
        $region79: #{tpu_custom_call.1} parent=39 // pred_check
          %p402 = pneg %p192
        $region80: #{tpu_custom_call.1} parent=39 // pred_check_branch
          %404 = sbr.rel (%p402) target = $region82
        $region81: #{tpu_custom_call.1} parent=39 // pred_region
          %s405 = smul.u32 2, %s32
          %p406 = scmp.lt.s32.totalorder %s405, 3
          %s407 = scalar_select %p406, %s405, 3
          %s408 = scalar_lea.vmem %s6, %s407
          %s409 = smul.u32 2, %s32
        $region82: #{tpu_custom_call.1} parent=39 // pred_fallthru
          _
      $region40: #{tpu_custom_call.1} parent=5 // pred_fallthru
        _
      %p410 = scmp.le.s32.totalorder 1, %s24
      %p411 = scmp.lt.s32.totalorder %s24, 3
      %p412 = pnand %p410, %p411
      %p413 = pneg %p412
      // Predicated region
      $region83: #{tpu_custom_call.1} parent=5 // pred_check
        _
      $region84: #{tpu_custom_call.1} parent=5 // pred_check_branch
        %415 = sbr.rel (%p412) target = $region86
      $region85: #{tpu_custom_call.1} parent=5 // pred_region
        %s416 = ssub.s32 %s24, 1
        // Predicated region
        $region87: #{tpu_custom_call.1} parent=85 // pred_check
          %p417 = pneg %p62
        $region88: #{tpu_custom_call.1} parent=85 // pred_check_branch
          %419 = sbr.rel (%p417) target = $region90
        $region89: #{tpu_custom_call.1} parent=85 // pred_region
          %420 = dma.done [#allocation4], 4096
        $region90: #{tpu_custom_call.1} parent=85 // pred_fallthru
          _
        // Predicated region
        $region91: #{tpu_custom_call.1} parent=85 // pred_check
          %p421 = pneg %p83
        $region92: #{tpu_custom_call.1} parent=85 // pred_check_branch
          %423 = sbr.rel (%p421) target = $region94
        $region93: #{tpu_custom_call.1} parent=85 // pred_region
          %424 = dma.done [#allocation7], 4096
        $region94: #{tpu_custom_call.1} parent=85 // pred_fallthru
          _
        %s425 = sand.u32 %s159, 1
        %s426 = sand.u32 %s159, 1
        %s427 = smul.addr %s426, 32
        %s428 = scalar_lea.vmem [#allocation8], %s427
        // Predicated region
        $region95: #{tpu_custom_call.1} parent=85 // pred_check
          %p429 = pneg %p172
        $region96: #{tpu_custom_call.1} parent=85 // pred_check_branch
          %431 = sbr.rel (%p429) target = $region98
        $region97: #{tpu_custom_call.1} parent=85 // pred_region
          _
        $region98: #{tpu_custom_call.1} parent=85 // pred_fallthru
          _
        %p432 = pneg %p62
        %p433 = pneg %p59
        %p434 = pneg %p83
        %p435 = pneg %p80
        %p436 = pneg %p104
        %p437 = pneg %p101
        %p438 = pneg %p125
        %p439 = pneg %p122
        %p440 = pneg %p146
        %p441 = pneg %p143
        %s442 = sand.u32 %s159, 1
        %s443 = sand.u32 %s159, 1
        %s444 = smul.addr %s443, 32
        %s445 = scalar_lea.vmem [#allocation8], %s444
        %p446 = pneg %p172
        %p447 = pneg %p169
        %s448 = smul.u32 2, %s34
        %p449 = scmp.lt.s32.totalorder %s448, 3
        %s450 = scalar_select %p449, %s448, 3
        %s451 = scalar_lea.vmem %s6, %s450
        %p452 = pneg %p198
        %p453 = pneg %p195
        %s454 = smul.u32 16, %s33
        %p455 = scmp.lt.s32.totalorder %s454, 15
        %s456 = scalar_select %p455, %s454, 15
        %s457 = smul.addr %s456, 8
        %s458 = scalar_lea.vmem %s7, %s457
        %p459 = pneg %p224
        %p460 = pneg %p221
        %p461 = pneg %p252
        %p462 = pneg %p249
        %s463 = sand.u32 %s239, 1
        %s464 = scalar_lea.sflag [#allocation5], %s463
        %s465 = sand.u32 %s239, 1
        %s466 = smul.addr %s465, 128
        %s467 = scalar_lea.vmem [#allocation9], %s466
        %p468 = pneg %p280
        %p469 = pneg %p277
        %s470 = sand.u32 %s267, 1
        %s471 = scalar_lea.sflag [#allocation11], %s470
        %s472 = sand.u32 %s267, 1
        %s473 = smul.addr %s472, 128
        %s474 = scalar_lea.vmem [#allocation10], %s473
        %s475 = smul.u32 16, %s33
        %s476 = smul.u32 2, %s34
        %s477 = smul.u32 2, %s34
        %p478 = scmp.lt.s32.totalorder %s477, 3
        %s479 = scalar_select %p478, %s477, 3
        %s480 = scalar_lea.vmem %s6, %s479
        %s481 = smul.u32 2, %s34
        %s482 = smul.u32 16, %s33
        %p483 = scmp.lt.s32.totalorder %s482, 15
        %s484 = scalar_select %p483, %s482, 15
        %s485 = smul.addr %s484, 8
        %s486 = scalar_lea.vmem %s7, %s485
        %s487 = smul.u32 16, %s33
        %s488 = smul.u32 16, %s33
        %s489 = smul.u32 16, %s33
        %p491 = scmp.eq.s32.totalorder %s34, 0
        // Predicated region
        $region99: #{tpu_custom_call.1} parent=85 // pred_check
          %p492 = pneg %p491
        $region100: #{tpu_custom_call.1} parent=85 // pred_check_branch
          %494 = sbr.rel (%p492) target = $region102
        $region101: #{tpu_custom_call.1} parent=85 // pred_region
          %v495 = vld [vmem:[#allocation3] sm:$0xff]
          %v496 = vld [vmem:[#allocation3 + $0x8] sm:$0xff]
          %v497 = vld [vmem:[#allocation3 + $0x10] sm:$0xff]
          %v498 = vld [vmem:[#allocation3 + $0x18] sm:$0xff]
          %v499 = vld [vmem:[#allocation3 + $0x20] sm:$0xff]
          %v500 = vld [vmem:[#allocation3 + $0x28] sm:$0xff]
          %v501 = vld [vmem:[#allocation3 + $0x30] sm:$0xff]
          %v502 = vld [vmem:[#allocation3 + $0x38] sm:$0xff]
          %v503 = vld [vmem:[#allocation3 + $0x40] sm:$0xff]
          %v504 = vld [vmem:[#allocation3 + $0x48] sm:$0xff]
          %v505 = vld [vmem:[#allocation3 + $0x50] sm:$0xff]
          %v506 = vld [vmem:[#allocation3 + $0x58] sm:$0xff]
          %v507 = vld [vmem:[#allocation3 + $0x60] sm:$0xff]
          %v508 = vld [vmem:[#allocation3 + $0x68] sm:$0xff]
          %v509 = vld [vmem:[#allocation3 + $0x70] sm:$0xff]
          %v510 = vld [vmem:[#allocation3 + $0x78] sm:$0xff]
          %v511 = vld [vmem:[#allocation3 + $0x80] sm:$0xff]
          %v512 = vld [vmem:[#allocation3 + $0x88] sm:$0xff]
          %v513 = vld [vmem:[#allocation3 + $0x90] sm:$0xff]
          %v514 = vld [vmem:[#allocation3 + $0x98] sm:$0xff]
          %v515 = vld [vmem:[#allocation3 + $0xa0] sm:$0xff]
          %v516 = vld [vmem:[#allocation3 + $0xa8] sm:$0xff]
          %v517 = vld [vmem:[#allocation3 + $0xb0] sm:$0xff]
          %v518 = vld [vmem:[#allocation3 + $0xb8] sm:$0xff]
          %v519 = vld [vmem:[#allocation3 + $0xc0] sm:$0xff]
          %v520 = vld [vmem:[#allocation3 + $0xc8] sm:$0xff]
          %v521 = vld [vmem:[#allocation3 + $0xd0] sm:$0xff]
          %v522 = vld [vmem:[#allocation3 + $0xd8] sm:$0xff]
          %v523 = vld [vmem:[#allocation3 + $0xe0] sm:$0xff]
          %v524 = vld [vmem:[#allocation3 + $0xe8] sm:$0xff]
          %v525 = vld [vmem:[#allocation3 + $0xf0] sm:$0xff]
          %v526 = vld [vmem:[#allocation3 + $0xf8] sm:$0xff]
          %v527 = vld [vmem:[#allocation6] sm:$0xf]
          %v528 = vld [vmem:[#allocation6 + $0x4] sm:$0xf]
          %v529 = vld [vmem:[#allocation6 + $0x8] sm:$0xf]
          %v530 = vld [vmem:[#allocation6 + $0xc] sm:$0xf]
          %v531 = vld [vmem:[#allocation6 + $0x10] sm:$0xf]
          %v532 = vld [vmem:[#allocation6 + $0x14] sm:$0xf]
          %v533 = vld [vmem:[#allocation6 + $0x18] sm:$0xf]
          %v534 = vld [vmem:[#allocation6 + $0x1c] sm:$0xf]
          %v535 = vld [vmem:[#allocation6 + $0x20] sm:$0xf]
          %v536 = vld [vmem:[#allocation6 + $0x24] sm:$0xf]
          %v537 = vld [vmem:[#allocation6 + $0x28] sm:$0xf]
          %v538 = vld [vmem:[#allocation6 + $0x2c] sm:$0xf]
          %v539 = vld [vmem:[#allocation6 + $0x30] sm:$0xf]
          %v540 = vld [vmem:[#allocation6 + $0x34] sm:$0xf]
          %v541 = vld [vmem:[#allocation6 + $0x38] sm:$0xf]
          %v542 = vld [vmem:[#allocation6 + $0x3c] sm:$0xf]
          %v543 = vld [vmem:[#allocation6 + $0x40] sm:$0xf]
          %v544 = vld [vmem:[#allocation6 + $0x44] sm:$0xf]
          %v545 = vld [vmem:[#allocation6 + $0x48] sm:$0xf]
          %v546 = vld [vmem:[#allocation6 + $0x4c] sm:$0xf]
          %v547 = vld [vmem:[#allocation6 + $0x50] sm:$0xf]
          %v548 = vld [vmem:[#allocation6 + $0x54] sm:$0xf]
          %v549 = vld [vmem:[#allocation6 + $0x58] sm:$0xf]
          %v550 = vld [vmem:[#allocation6 + $0x5c] sm:$0xf]
          %v551 = vld [vmem:[#allocation6 + $0x60] sm:$0xf]
          %v552 = vld [vmem:[#allocation6 + $0x64] sm:$0xf]
          %v553 = vld [vmem:[#allocation6 + $0x68] sm:$0xf]
          %v554 = vld [vmem:[#allocation6 + $0x6c] sm:$0xf]
          %v555 = vld [vmem:[#allocation6 + $0x70] sm:$0xf]
          %v556 = vld [vmem:[#allocation6 + $0x74] sm:$0xf]
          %v557 = vld [vmem:[#allocation6 + $0x78] sm:$0xf]
          %v558 = vld [vmem:[#allocation6 + $0x7c] sm:$0xf]
          %v559 = vld [vmem:[#allocation6 + $0x80] sm:$0xf]
          %v560 = vld [vmem:[#allocation6 + $0x84] sm:$0xf]
          %v561 = vld [vmem:[#allocation6 + $0x88] sm:$0xf]
          %v562 = vld [vmem:[#allocation6 + $0x8c] sm:$0xf]
          %v563 = vld [vmem:[#allocation6 + $0x90] sm:$0xf]
          %v564 = vld [vmem:[#allocation6 + $0x94] sm:$0xf]
          %v565 = vld [vmem:[#allocation6 + $0x98] sm:$0xf]
          %v566 = vld [vmem:[#allocation6 + $0x9c] sm:$0xf]
          %v567 = vld [vmem:[#allocation6 + $0xa0] sm:$0xf]
          %v568 = vld [vmem:[#allocation6 + $0xa4] sm:$0xf]
          %v569 = vld [vmem:[#allocation6 + $0xa8] sm:$0xf]
          %v570 = vld [vmem:[#allocation6 + $0xac] sm:$0xf]
          %v571 = vld [vmem:[#allocation6 + $0xb0] sm:$0xf]
          %v572 = vld [vmem:[#allocation6 + $0xb4] sm:$0xf]
          %v573 = vld [vmem:[#allocation6 + $0xb8] sm:$0xf]
          %v574 = vld [vmem:[#allocation6 + $0xbc] sm:$0xf]
          %v575 = vld [vmem:[#allocation6 + $0xc0] sm:$0xf]
          %v576 = vld [vmem:[#allocation6 + $0xc4] sm:$0xf]
          %v577 = vld [vmem:[#allocation6 + $0xc8] sm:$0xf]
          %v578 = vld [vmem:[#allocation6 + $0xcc] sm:$0xf]
          %v579 = vld [vmem:[#allocation6 + $0xd0] sm:$0xf]
          %v580 = vld [vmem:[#allocation6 + $0xd4] sm:$0xf]
          %v581 = vld [vmem:[#allocation6 + $0xd8] sm:$0xf]
          %v582 = vld [vmem:[#allocation6 + $0xdc] sm:$0xf]
          %v583 = vld [vmem:[#allocation6 + $0xe0] sm:$0xf]
          %v584 = vld [vmem:[#allocation6 + $0xe4] sm:$0xf]
          %v585 = vld [vmem:[#allocation6 + $0xe8] sm:$0xf]
          %v586 = vld [vmem:[#allocation6 + $0xec] sm:$0xf]
          %v587 = vld [vmem:[#allocation6 + $0xf0] sm:$0xf]
          %v588 = vld [vmem:[#allocation6 + $0xf4] sm:$0xf]
          %v589 = vld [vmem:[#allocation6 + $0xf8] sm:$0xf]
          %v590 = vld [vmem:[#allocation6 + $0xfc] sm:$0xf]
          %v591 = vld [vmem:[%s2] sm:$0x1]
          %v593 = vlaneseq
          %v594 = vshrl.u32 %v593, 7
          %v595 = vsub.s32 0, %v594
          %v596 = vrot.slane %v591, %v595
          %v630 = vunpack.c.l.b16 %v495
          %v631 = vunpack.c.h.b16 %v495
          %v632 = vunpack.c.l.b16 %v496
          %v633 = vunpack.c.h.b16 %v496
          %v634 = vunpack.c.l.b16 %v497
          %v635 = vunpack.c.h.b16 %v497
          %v636 = vunpack.c.l.b16 %v498
          %v637 = vunpack.c.h.b16 %v498
          %v638 = vunpack.c.l.b16 %v499
          %v639 = vunpack.c.h.b16 %v499
          %v640 = vunpack.c.l.b16 %v500
          %v641 = vunpack.c.h.b16 %v500
          %v642 = vunpack.c.l.b16 %v501
          %v643 = vunpack.c.h.b16 %v501
          %v644 = vunpack.c.l.b16 %v502
          %v645 = vunpack.c.h.b16 %v502
          %v646 = vunpack.c.l.b16 %v503
          %v647 = vunpack.c.h.b16 %v503
          %v648 = vunpack.c.l.b16 %v504
          %v649 = vunpack.c.h.b16 %v504
          %v650 = vunpack.c.l.b16 %v505
          %v651 = vunpack.c.h.b16 %v505
          %v652 = vunpack.c.l.b16 %v506
          %v653 = vunpack.c.h.b16 %v506
          %v654 = vunpack.c.l.b16 %v507
          %v655 = vunpack.c.h.b16 %v507
          %v656 = vunpack.c.l.b16 %v508
          %v657 = vunpack.c.h.b16 %v508
          %v658 = vunpack.c.l.b16 %v509
          %v659 = vunpack.c.h.b16 %v509
          %v660 = vunpack.c.l.b16 %v510
          %v661 = vunpack.c.h.b16 %v510
          %v662 = vunpack.c.l.b16 %v511
          %v663 = vunpack.c.h.b16 %v511
          %v664 = vunpack.c.l.b16 %v512
          %v665 = vunpack.c.h.b16 %v512
          %v666 = vunpack.c.l.b16 %v513
          %v667 = vunpack.c.h.b16 %v513
          %v668 = vunpack.c.l.b16 %v514
          %v669 = vunpack.c.h.b16 %v514
          %v670 = vunpack.c.l.b16 %v515
          %v671 = vunpack.c.h.b16 %v515
          %v672 = vunpack.c.l.b16 %v516
          %v673 = vunpack.c.h.b16 %v516
          %v674 = vunpack.c.l.b16 %v517
          %v675 = vunpack.c.h.b16 %v517
          %v676 = vunpack.c.l.b16 %v518
          %v677 = vunpack.c.h.b16 %v518
          %v678 = vunpack.c.l.b16 %v519
          %v679 = vunpack.c.h.b16 %v519
          %v680 = vunpack.c.l.b16 %v520
          %v681 = vunpack.c.h.b16 %v520
          %v682 = vunpack.c.l.b16 %v521
          %v683 = vunpack.c.h.b16 %v521
          %v684 = vunpack.c.l.b16 %v522
          %v685 = vunpack.c.h.b16 %v522
          %v686 = vunpack.c.l.b16 %v523
          %v687 = vunpack.c.h.b16 %v523
          %v688 = vunpack.c.l.b16 %v524
          %v689 = vunpack.c.h.b16 %v524
          %v690 = vunpack.c.l.b16 %v525
          %v691 = vunpack.c.h.b16 %v525
          %v692 = vunpack.c.l.b16 %v526
          %v693 = vunpack.c.h.b16 %v526
          %v694 = vpack.c.b16 %v634, %v630
          %v695 = vpack.c.b16 %v635, %v631
          %v696 = vpack.c.b16 %v636, %v632
          %v697 = vpack.c.b16 %v637, %v633
          %v698 = vpack.c.b16 %v642, %v638
          %v699 = vpack.c.b16 %v643, %v639
          %v700 = vpack.c.b16 %v644, %v640
          %v701 = vpack.c.b16 %v645, %v641
          %v702 = vpack.c.b16 %v650, %v646
          %v703 = vpack.c.b16 %v651, %v647
          %v704 = vpack.c.b16 %v652, %v648
          %v705 = vpack.c.b16 %v653, %v649
          %v706 = vpack.c.b16 %v658, %v654
          %v707 = vpack.c.b16 %v659, %v655
          %v708 = vpack.c.b16 %v660, %v656
          %v709 = vpack.c.b16 %v661, %v657
          %v710 = vpack.c.b16 %v666, %v662
          %v711 = vpack.c.b16 %v667, %v663
          %v712 = vpack.c.b16 %v668, %v664
          %v713 = vpack.c.b16 %v669, %v665
          %v714 = vpack.c.b16 %v674, %v670
          %v715 = vpack.c.b16 %v675, %v671
          %v716 = vpack.c.b16 %v676, %v672
          %v717 = vpack.c.b16 %v677, %v673
          %v718 = vpack.c.b16 %v682, %v678
          %v719 = vpack.c.b16 %v683, %v679
          %v720 = vpack.c.b16 %v684, %v680
          %v721 = vpack.c.b16 %v685, %v681
          %v722 = vpack.c.b16 %v690, %v686
          %v723 = vpack.c.b16 %v691, %v687
          %v724 = vpack.c.b16 %v692, %v688
          %v725 = vpack.c.b16 %v693, %v689
          %v822 = vunpack.c.l.b16 %v527
          %v823 = vunpack.c.l.b16 %v528
          %v824 = vunpack.c.l.b16 %v529
          %v825 = vunpack.c.l.b16 %v530
          %v826 = vunpack.c.l.b16 %v531
          %v827 = vunpack.c.l.b16 %v532
          %v828 = vunpack.c.l.b16 %v533
          %v829 = vunpack.c.l.b16 %v534
          %v830 = vunpack.c.l.b16 %v535
          %v831 = vunpack.c.l.b16 %v536
          %v832 = vunpack.c.l.b16 %v537
          %v833 = vunpack.c.l.b16 %v538
          %v834 = vunpack.c.l.b16 %v539
          %v835 = vunpack.c.l.b16 %v540
          %v836 = vunpack.c.l.b16 %v541
          %v837 = vunpack.c.l.b16 %v542
          %v838 = vunpack.c.l.b16 %v543
          %v839 = vunpack.c.l.b16 %v544
          %v840 = vunpack.c.l.b16 %v545
          %v841 = vunpack.c.l.b16 %v546
          %v842 = vunpack.c.l.b16 %v547
          %v843 = vunpack.c.l.b16 %v548
          %v844 = vunpack.c.l.b16 %v549
          %v845 = vunpack.c.l.b16 %v550
          %v846 = vunpack.c.l.b16 %v551
          %v847 = vunpack.c.l.b16 %v552
          %v848 = vunpack.c.l.b16 %v553
          %v849 = vunpack.c.l.b16 %v554
          %v850 = vunpack.c.l.b16 %v555
          %v851 = vunpack.c.l.b16 %v556
          %v852 = vunpack.c.l.b16 %v557
          %v853 = vunpack.c.l.b16 %v558
          %v854 = vunpack.c.l.b16 %v559
          %v855 = vunpack.c.l.b16 %v560
          %v856 = vunpack.c.l.b16 %v561
          %v857 = vunpack.c.l.b16 %v562
          %v858 = vunpack.c.l.b16 %v563
          %v859 = vunpack.c.l.b16 %v564
          %v860 = vunpack.c.l.b16 %v565
          %v861 = vunpack.c.l.b16 %v566
          %v862 = vunpack.c.l.b16 %v567
          %v863 = vunpack.c.l.b16 %v568
          %v864 = vunpack.c.l.b16 %v569
          %v865 = vunpack.c.l.b16 %v570
          %v866 = vunpack.c.l.b16 %v571
          %v867 = vunpack.c.l.b16 %v572
          %v868 = vunpack.c.l.b16 %v573
          %v869 = vunpack.c.l.b16 %v574
          %v870 = vunpack.c.l.b16 %v575
          %v871 = vunpack.c.l.b16 %v576
          %v872 = vunpack.c.l.b16 %v577
          %v873 = vunpack.c.l.b16 %v578
          %v874 = vunpack.c.l.b16 %v579
          %v875 = vunpack.c.l.b16 %v580
          %v876 = vunpack.c.l.b16 %v581
          %v877 = vunpack.c.l.b16 %v582
          %v878 = vunpack.c.l.b16 %v583
          %v879 = vunpack.c.l.b16 %v584
          %v880 = vunpack.c.l.b16 %v585
          %v881 = vunpack.c.l.b16 %v586
          %v882 = vunpack.c.l.b16 %v587
          %v883 = vunpack.c.l.b16 %v588
          %v884 = vunpack.c.l.b16 %v589
          %v885 = vunpack.c.l.b16 %v590
          %v886 = vpack.c.b16 %v823, %v822
          %v887 = vpack.c.b16 %v825, %v824
          %v888 = vpack.c.b16 %v827, %v826
          %v889 = vpack.c.b16 %v829, %v828
          %v890 = vpack.c.b16 %v831, %v830
          %v891 = vpack.c.b16 %v833, %v832
          %v892 = vpack.c.b16 %v835, %v834
          %v893 = vpack.c.b16 %v837, %v836
          %v894 = vpack.c.b16 %v839, %v838
          %v895 = vpack.c.b16 %v841, %v840
          %v896 = vpack.c.b16 %v843, %v842
          %v897 = vpack.c.b16 %v845, %v844
          %v898 = vpack.c.b16 %v847, %v846
          %v899 = vpack.c.b16 %v849, %v848
          %v900 = vpack.c.b16 %v851, %v850
          %v901 = vpack.c.b16 %v853, %v852
          %v902 = vpack.c.b16 %v855, %v854
          %v903 = vpack.c.b16 %v857, %v856
          %v904 = vpack.c.b16 %v859, %v858
          %v905 = vpack.c.b16 %v861, %v860
          %v906 = vpack.c.b16 %v863, %v862
          %v907 = vpack.c.b16 %v865, %v864
          %v908 = vpack.c.b16 %v867, %v866
          %v909 = vpack.c.b16 %v869, %v868
          %v910 = vpack.c.b16 %v871, %v870
          %v911 = vpack.c.b16 %v873, %v872
          %v912 = vpack.c.b16 %v875, %v874
          %v913 = vpack.c.b16 %v877, %v876
          %v914 = vpack.c.b16 %v879, %v878
          %v915 = vpack.c.b16 %v881, %v880
          %v916 = vpack.c.b16 %v883, %v882
          %v917 = vpack.c.b16 %v885, %v884
          %950 = vmatprep.subr.bf16.mxu0 0
          %951 = vmatpush1.bf16.msra.mxu0 %v893
          %952 = vmatprep.subr.bf16.mxu0 0
          %953 = vmatpush1.bf16.msra.mxu0 %v892
          %954 = vmatprep.subr.bf16.mxu0 0
          %955 = vmatpush1.bf16.msra.mxu0 %v891
          %956 = vmatprep.subr.bf16.mxu0 0
          %957 = vmatpush1.bf16.msra.mxu0 %v890
          %958 = vmatprep.subr.bf16.mxu0 0
          %959 = vmatpush1.bf16.msra.mxu0 %v889
          %960 = vmatprep.subr.bf16.mxu0 0
          %961 = vmatpush1.bf16.msra.mxu0 %v888
          %962 = vmatprep.subr.bf16.mxu0 0
          %963 = vmatpush1.bf16.msra.mxu0 %v887
          %964 = vmatprep.subr.bf16.mxu0 0
          %965 = vmatpush1.bf16.msra.mxu0 %v886
          %966 = vmatprep.subr.bf16.mxu0 0
          %967 = vmatpush2.bf16.msra.mxu0 %v901
          %968 = vmatprep.subr.bf16.mxu0 0
          %969 = vmatpush2.bf16.msra.mxu0 %v900
          %970 = vmatprep.subr.bf16.mxu0 0
          %971 = vmatpush2.bf16.msra.mxu0 %v899
          %972 = vmatprep.subr.bf16.mxu0 0
          %973 = vmatpush2.bf16.msra.mxu0 %v898
          %974 = vmatprep.subr.bf16.mxu0 0
          %975 = vmatpush2.bf16.msra.mxu0 %v897
          %976 = vmatprep.subr.bf16.mxu0 0
          %977 = vmatpush2.bf16.msra.mxu0 %v896
          %978 = vmatprep.subr.bf16.mxu0 0
          %979 = vmatpush2.bf16.msra.mxu0 %v895
          %980 = vmatprep.subr.bf16.mxu0 0
          %981 = vmatpush2.bf16.msra.mxu0 %v894
          %982 = vmatprep.mubr.bf16.mxu0 %v695
          %983 = vmatmul.mubr.bf16.gmra.mxu0 %v694
          %v984 = vpop.f32.mrf.mxu0
          %v985 = vadd.f32 %v596, %v984
          %v986 = vpop.f32.mrf.mxu0
          %v987 = vpop.f32.mrf.mxu0
          %v988 = vadd.f32 %v596, %v987
          %v989 = vpop.f32.mrf.mxu0
          %990 = vmatprep.mubr.bf16.mxu0 %v699
          %991 = vmatmul.mubr.bf16.gmra.mxu0 %v698
          %v992 = vpop.f32.mrf.mxu0
          %v993 = vadd.f32 %v596, %v992
          %v994 = vpop.f32.mrf.mxu0
          %v995 = vpop.f32.mrf.mxu0
          %v996 = vadd.f32 %v596, %v995
          %v997 = vpop.f32.mrf.mxu0
          %998 = vmatprep.mubr.bf16.mxu0 %v703
          %999 = vmatmul.mubr.bf16.gmra.mxu0 %v702
          %v1000 = vpop.f32.mrf.mxu0
          %v1001 = vadd.f32 %v596, %v1000
          %v1002 = vpop.f32.mrf.mxu0
          %v1003 = vpop.f32.mrf.mxu0
          %v1004 = vadd.f32 %v596, %v1003
          %v1005 = vpop.f32.mrf.mxu0
          %1006 = vmatprep.mubr.bf16.mxu0 %v707
          %1007 = vmatmul.mubr.bf16.gmra.mxu0 %v706
          %v1008 = vpop.f32.mrf.mxu0
          %v1009 = vadd.f32 %v596, %v1008
          %v1010 = vpop.f32.mrf.mxu0
          %v1011 = vpop.f32.mrf.mxu0
          %v1012 = vadd.f32 %v596, %v1011
          %v1013 = vpop.f32.mrf.mxu0
          %1014 = vmatprep.mubr.bf16.mxu0 %v711
          %1015 = vmatmul.mubr.bf16.gmra.mxu0 %v710
          %v1016 = vpop.f32.mrf.mxu0
          %v1017 = vadd.f32 %v596, %v1016
          %v1018 = vpop.f32.mrf.mxu0
          %v1019 = vpop.f32.mrf.mxu0
          %v1020 = vadd.f32 %v596, %v1019
          %v1021 = vpop.f32.mrf.mxu0
          %1022 = vmatprep.mubr.bf16.mxu0 %v715
          %1023 = vmatmul.mubr.bf16.gmra.mxu0 %v714
          %v1024 = vpop.f32.mrf.mxu0
          %v1025 = vadd.f32 %v596, %v1024
          %v1026 = vpop.f32.mrf.mxu0
          %v1027 = vpop.f32.mrf.mxu0
          %v1028 = vadd.f32 %v596, %v1027
          %v1029 = vpop.f32.mrf.mxu0
          %1030 = vmatprep.mubr.bf16.mxu0 %v719
          %1031 = vmatmul.mubr.bf16.gmra.mxu0 %v718
          %v1032 = vpop.f32.mrf.mxu0
          %v1033 = vadd.f32 %v596, %v1032
          %v1034 = vpop.f32.mrf.mxu0
          %v1035 = vpop.f32.mrf.mxu0
          %v1036 = vadd.f32 %v596, %v1035
          %v1037 = vpop.f32.mrf.mxu0
          %1038 = vmatprep.mubr.bf16.mxu0 %v723
          %1039 = vmatmul.mubr.bf16.gmra.mxu0 %v722
          %v1040 = vpop.f32.mrf.mxu0
          %v1041 = vadd.f32 %v596, %v1040
          %v1042 = vpop.f32.mrf.mxu0
          %v1043 = vpop.f32.mrf.mxu0
          %v1044 = vadd.f32 %v596, %v1043
          %v1045 = vpop.f32.mrf.mxu0
          %1046 = vdwg.mxu0
          %1047 = vmatprep.subr.bf16.mxu0 0
          %1048 = vmatpush1.bf16.msra.mxu0 %v909
          %1049 = vmatprep.subr.bf16.mxu0 0
          %1050 = vmatpush1.bf16.msra.mxu0 %v908
          %1051 = vmatprep.subr.bf16.mxu0 0
          %1052 = vmatpush1.bf16.msra.mxu0 %v907
          %1053 = vmatprep.subr.bf16.mxu0 0
          %1054 = vmatpush1.bf16.msra.mxu0 %v906
          %1055 = vmatprep.subr.bf16.mxu0 0
          %1056 = vmatpush1.bf16.msra.mxu0 %v905
          %1057 = vmatprep.subr.bf16.mxu0 0
          %1058 = vmatpush1.bf16.msra.mxu0 %v904
          %1059 = vmatprep.subr.bf16.mxu0 0
          %1060 = vmatpush1.bf16.msra.mxu0 %v903
          %1061 = vmatprep.subr.bf16.mxu0 0
          %1062 = vmatpush1.bf16.msra.mxu0 %v902
          %1063 = vmatprep.subr.bf16.mxu0 0
          %1064 = vmatpush2.bf16.msra.mxu0 %v917
          %1065 = vmatprep.subr.bf16.mxu0 0
          %1066 = vmatpush2.bf16.msra.mxu0 %v916
          %1067 = vmatprep.subr.bf16.mxu0 0
          %1068 = vmatpush2.bf16.msra.mxu0 %v915
          %1069 = vmatprep.subr.bf16.mxu0 0
          %1070 = vmatpush2.bf16.msra.mxu0 %v914
          %1071 = vmatprep.subr.bf16.mxu0 0
          %1072 = vmatpush2.bf16.msra.mxu0 %v913
          %1073 = vmatprep.subr.bf16.mxu0 0
          %1074 = vmatpush2.bf16.msra.mxu0 %v912
          %1075 = vmatprep.subr.bf16.mxu0 0
          %1076 = vmatpush2.bf16.msra.mxu0 %v911
          %1077 = vmatprep.subr.bf16.mxu0 0
          %1078 = vmatpush2.bf16.msra.mxu0 %v910
          %1079 = vmatprep.mubr.bf16.mxu0 %v697
          %1080 = vmatmul.mubr.bf16.gmra.mxu0 %v696
          %v1081 = vpop.f32.mrf.mxu0
          %v1082 = vadd.f32 %v985, %v1081
          %v1083 = vpop.f32.mrf.mxu0
          %v1084 = vpop.f32.mrf.mxu0
          %v1085 = vadd.f32 %v988, %v1084
          %v1086 = vpop.f32.mrf.mxu0
          %1087 = vmatprep.mubr.bf16.mxu0 %v701
          %1088 = vmatmul.mubr.bf16.gmra.mxu0 %v700
          %v1089 = vpop.f32.mrf.mxu0
          %v1090 = vadd.f32 %v993, %v1089
          %v1091 = vpop.f32.mrf.mxu0
          %v1092 = vpop.f32.mrf.mxu0
          %v1093 = vadd.f32 %v996, %v1092
          %v1094 = vpop.f32.mrf.mxu0
          %1095 = vmatprep.mubr.bf16.mxu0 %v705
          %1096 = vmatmul.mubr.bf16.gmra.mxu0 %v704
          %v1097 = vpop.f32.mrf.mxu0
          %v1098 = vadd.f32 %v1001, %v1097
          %v1099 = vpop.f32.mrf.mxu0
          %v1100 = vpop.f32.mrf.mxu0
          %v1101 = vadd.f32 %v1004, %v1100
          %v1102 = vpop.f32.mrf.mxu0
          %1103 = vmatprep.mubr.bf16.mxu0 %v709
          %1104 = vmatmul.mubr.bf16.gmra.mxu0 %v708
          %v1105 = vpop.f32.mrf.mxu0
          %v1106 = vadd.f32 %v1009, %v1105
          %v1107 = vpop.f32.mrf.mxu0
          %v1108 = vpop.f32.mrf.mxu0
          %v1109 = vadd.f32 %v1012, %v1108
          %v1110 = vpop.f32.mrf.mxu0
          %1111 = vmatprep.mubr.bf16.mxu0 %v713
          %1112 = vmatmul.mubr.bf16.gmra.mxu0 %v712
          %v1113 = vpop.f32.mrf.mxu0
          %v1114 = vadd.f32 %v1017, %v1113
          %v1115 = vpop.f32.mrf.mxu0
          %v1116 = vpop.f32.mrf.mxu0
          %v1117 = vadd.f32 %v1020, %v1116
          %v1118 = vpop.f32.mrf.mxu0
          %1119 = vmatprep.mubr.bf16.mxu0 %v717
          %1120 = vmatmul.mubr.bf16.gmra.mxu0 %v716
          %v1121 = vpop.f32.mrf.mxu0
          %v1122 = vadd.f32 %v1025, %v1121
          %v1123 = vpop.f32.mrf.mxu0
          %v1124 = vpop.f32.mrf.mxu0
          %v1125 = vadd.f32 %v1028, %v1124
          %v1126 = vpop.f32.mrf.mxu0
          %1127 = vmatprep.mubr.bf16.mxu0 %v721
          %1128 = vmatmul.mubr.bf16.gmra.mxu0 %v720
          %v1129 = vpop.f32.mrf.mxu0
          %v1130 = vadd.f32 %v1033, %v1129
          %v1131 = vpop.f32.mrf.mxu0
          %v1132 = vpop.f32.mrf.mxu0
          %v1133 = vadd.f32 %v1036, %v1132
          %v1134 = vpop.f32.mrf.mxu0
          %1135 = vmatprep.mubr.bf16.mxu0 %v725
          %1136 = vmatmul.mubr.bf16.gmra.mxu0 %v724
          %v1137 = vpop.f32.mrf.mxu0
          %v1138 = vadd.f32 %v1041, %v1137
          %v1139 = vpop.f32.mrf.mxu0
          %v1140 = vpop.f32.mrf.mxu0
          %v1141 = vadd.f32 %v1044, %v1140
          %v1142 = vpop.f32.mrf.mxu0
          %1143 = vdwg.mxu0
          %v1144 = vmax.f32 %v1082, 0.0
          %v1145 = vmax.f32 %v1085, 0.0
          %v1146 = vmax.f32 %v1090, 0.0
          %v1147 = vmax.f32 %v1093, 0.0
          %v1148 = vmax.f32 %v1098, 0.0
          %v1149 = vmax.f32 %v1101, 0.0
          %v1150 = vmax.f32 %v1106, 0.0
          %v1151 = vmax.f32 %v1109, 0.0
          %v1152 = vmax.f32 %v1114, 0.0
          %v1153 = vmax.f32 %v1117, 0.0
          %v1154 = vmax.f32 %v1122, 0.0
          %v1155 = vmax.f32 %v1125, 0.0
          %v1156 = vmax.f32 %v1130, 0.0
          %v1157 = vmax.f32 %v1133, 0.0
          %v1158 = vmax.f32 %v1138, 0.0
          %v1159 = vmax.f32 %v1141, 0.0
          %v1160 = vpack.c.bf16 %v1145, %v1144
          %v1161 = vpack.c.bf16 %v1147, %v1146
          %v1162 = vpack.c.bf16 %v1149, %v1148
          %v1163 = vpack.c.bf16 %v1151, %v1150
          %v1164 = vpack.c.bf16 %v1153, %v1152
          %v1165 = vpack.c.bf16 %v1155, %v1154
          %v1166 = vpack.c.bf16 %v1157, %v1156
          %v1167 = vpack.c.bf16 %v1159, %v1158
          %v1168 = vld [vmem:[%s3] sm:$0xf]
          %v1169 = vld [vmem:[%s3 + $0x4] sm:$0xf]
          %v1170 = vld [vmem:[%s3 + $0x8] sm:$0xf]
          %v1171 = vld [vmem:[%s3 + $0xc] sm:$0xf]
          %v1172 = vld [vmem:[%s3 + $0x10] sm:$0xf]
          %v1173 = vld [vmem:[%s3 + $0x14] sm:$0xf]
          %v1174 = vld [vmem:[%s3 + $0x18] sm:$0xf]
          %v1175 = vld [vmem:[%s3 + $0x1c] sm:$0xf]
          %v1176 = vld [vmem:[%s3 + $0x20] sm:$0xf]
          %v1177 = vld [vmem:[%s3 + $0x24] sm:$0xf]
          %v1178 = vld [vmem:[%s3 + $0x28] sm:$0xf]
          %v1179 = vld [vmem:[%s3 + $0x2c] sm:$0xf]
          %v1180 = vld [vmem:[%s3 + $0x30] sm:$0xf]
          %v1181 = vld [vmem:[%s3 + $0x34] sm:$0xf]
          %v1182 = vld [vmem:[%s3 + $0x38] sm:$0xf]
          %v1183 = vld [vmem:[%s3 + $0x3c] sm:$0xf]
          %v1184 = vld [vmem:[%s4] sm:$0x1]
          %v1186 = vlaneseq
          %v1187 = vshrl.u32 %v1186, 7
          %v1188 = vsub.s32 0, %v1187
          %v1189 = vrot.slane %v1184, %v1188
          %v1207 = vunpack.c.l.b16 %v1168
          %v1208 = vunpack.c.l.b16 %v1169
          %v1209 = vunpack.c.l.b16 %v1170
          %v1210 = vunpack.c.l.b16 %v1171
          %v1211 = vunpack.c.l.b16 %v1172
          %v1212 = vunpack.c.l.b16 %v1173
          %v1213 = vunpack.c.l.b16 %v1174
          %v1214 = vunpack.c.l.b16 %v1175
          %v1215 = vunpack.c.l.b16 %v1176
          %v1216 = vunpack.c.l.b16 %v1177
          %v1217 = vunpack.c.l.b16 %v1178
          %v1218 = vunpack.c.l.b16 %v1179
          %v1219 = vunpack.c.l.b16 %v1180
          %v1220 = vunpack.c.l.b16 %v1181
          %v1221 = vunpack.c.l.b16 %v1182
          %v1222 = vunpack.c.l.b16 %v1183
          %v1223 = vpack.c.b16 %v1208, %v1207
          %v1224 = vpack.c.b16 %v1210, %v1209
          %v1225 = vpack.c.b16 %v1212, %v1211
          %v1226 = vpack.c.b16 %v1214, %v1213
          %v1227 = vpack.c.b16 %v1216, %v1215
          %v1228 = vpack.c.b16 %v1218, %v1217
          %v1229 = vpack.c.b16 %v1220, %v1219
          %v1230 = vpack.c.b16 %v1222, %v1221
          %1239 = vmatprep.subr.bf16.mxu0 0
          %1240 = vmatpush1.bf16.msra.mxu0 %v1230
          %1241 = vmatprep.subr.bf16.mxu0 0
          %1242 = vmatpush1.bf16.msra.mxu0 %v1229
          %1243 = vmatprep.subr.bf16.mxu0 0
          %1244 = vmatpush1.bf16.msra.mxu0 %v1228
          %1245 = vmatprep.subr.bf16.mxu0 0
          %1246 = vmatpush1.bf16.msra.mxu0 %v1227
          %1247 = vmatprep.subr.bf16.mxu0 0
          %1248 = vmatpush1.bf16.msra.mxu0 %v1226
          %1249 = vmatprep.subr.bf16.mxu0 0
          %1250 = vmatpush1.bf16.msra.mxu0 %v1225
          %1251 = vmatprep.subr.bf16.mxu0 0
          %1252 = vmatpush1.bf16.msra.mxu0 %v1224
          %1253 = vmatprep.subr.bf16.mxu0 0
          %1254 = vmatpush1.bf16.msra.mxu0 %v1223
          %1255 = vmatprep.subr.bf16.mxu0 0
          %1256 = vmatpush2.bf16.msra.mxu0 0
          %1257 = vmatprep.subr.bf16.mxu0 0
          %1258 = vmatpush2.bf16.msra.mxu0 0
          %1259 = vmatprep.subr.bf16.mxu0 0
          %1260 = vmatpush2.bf16.msra.mxu0 0
          %1261 = vmatprep.subr.bf16.mxu0 0
          %1262 = vmatpush2.bf16.msra.mxu0 0
          %1263 = vmatprep.subr.bf16.mxu0 0
          %1264 = vmatpush2.bf16.msra.mxu0 0
          %1265 = vmatprep.subr.bf16.mxu0 0
          %1266 = vmatpush2.bf16.msra.mxu0 0
          %1267 = vmatprep.subr.bf16.mxu0 0
          %1268 = vmatpush2.bf16.msra.mxu0 0
          %1269 = vmatprep.subr.bf16.mxu0 0
          %1270 = vmatpush2.bf16.msra.mxu0 0
          %1271 = vmatprep.mubr.bf16.mxu0 0
          %1272 = vmatmul.mubr.bf16.gmra.mxu0 %v1160
          %v1273 = vpop.f32.mrf.mxu0
          %v1274 = vadd.f32 %v1189, %v1273
          %v1275 = vpop.f32.mrf.mxu0
          %v1276 = vpop.f32.mrf.mxu0
          %v1277 = vadd.f32 %v1189, %v1276
          %v1278 = vpop.f32.mrf.mxu0
          %1279 = vmatprep.mubr.bf16.mxu0 0
          %1280 = vmatmul.mubr.bf16.gmra.mxu0 %v1161
          %v1281 = vpop.f32.mrf.mxu0
          %v1282 = vadd.f32 %v1189, %v1281
          %v1283 = vpop.f32.mrf.mxu0
          %v1284 = vpop.f32.mrf.mxu0
          %v1285 = vadd.f32 %v1189, %v1284
          %v1286 = vpop.f32.mrf.mxu0
          %1287 = vmatprep.mubr.bf16.mxu0 0
          %1288 = vmatmul.mubr.bf16.gmra.mxu0 %v1162
          %v1289 = vpop.f32.mrf.mxu0
          %v1290 = vadd.f32 %v1189, %v1289
          %v1291 = vpop.f32.mrf.mxu0
          %v1292 = vpop.f32.mrf.mxu0
          %v1293 = vadd.f32 %v1189, %v1292
          %v1294 = vpop.f32.mrf.mxu0
          %1295 = vmatprep.mubr.bf16.mxu0 0
          %1296 = vmatmul.mubr.bf16.gmra.mxu0 %v1163
          %v1297 = vpop.f32.mrf.mxu0
          %v1298 = vadd.f32 %v1189, %v1297
          %v1299 = vpop.f32.mrf.mxu0
          %v1300 = vpop.f32.mrf.mxu0
          %v1301 = vadd.f32 %v1189, %v1300
          %v1302 = vpop.f32.mrf.mxu0
          %1303 = vmatprep.mubr.bf16.mxu0 0
          %1304 = vmatmul.mubr.bf16.gmra.mxu0 %v1164
          %v1305 = vpop.f32.mrf.mxu0
          %v1306 = vadd.f32 %v1189, %v1305
          %v1307 = vpop.f32.mrf.mxu0
          %v1308 = vpop.f32.mrf.mxu0
          %v1309 = vadd.f32 %v1189, %v1308
          %v1310 = vpop.f32.mrf.mxu0
          %1311 = vmatprep.mubr.bf16.mxu0 0
          %1312 = vmatmul.mubr.bf16.gmra.mxu0 %v1165
          %v1313 = vpop.f32.mrf.mxu0
          %v1314 = vadd.f32 %v1189, %v1313
          %v1315 = vpop.f32.mrf.mxu0
          %v1316 = vpop.f32.mrf.mxu0
          %v1317 = vadd.f32 %v1189, %v1316
          %v1318 = vpop.f32.mrf.mxu0
          %1319 = vmatprep.mubr.bf16.mxu0 0
          %1320 = vmatmul.mubr.bf16.gmra.mxu0 %v1166
          %v1321 = vpop.f32.mrf.mxu0
          %v1322 = vadd.f32 %v1189, %v1321
          %v1323 = vpop.f32.mrf.mxu0
          %v1324 = vpop.f32.mrf.mxu0
          %v1325 = vadd.f32 %v1189, %v1324
          %v1326 = vpop.f32.mrf.mxu0
          %1327 = vmatprep.mubr.bf16.mxu0 0
          %1328 = vmatmul.mubr.bf16.gmra.mxu0 %v1167
          %v1329 = vpop.f32.mrf.mxu0
          %v1330 = vadd.f32 %v1189, %v1329
          %v1331 = vpop.f32.mrf.mxu0
          %v1332 = vpop.f32.mrf.mxu0
          %v1333 = vadd.f32 %v1189, %v1332
          %v1334 = vpop.f32.mrf.mxu0
          %1335 = vdwg.mxu0
          %v1336 = vpack.c.bf16 %v1277, %v1274
          %v1337 = vpack.c.bf16 %v1285, %v1282
          %v1338 = vpack.c.bf16 %v1293, %v1290
          %v1339 = vpack.c.bf16 %v1301, %v1298
          %v1340 = vpack.c.bf16 %v1309, %v1306
          %v1341 = vpack.c.bf16 %v1317, %v1314
          %v1342 = vpack.c.bf16 %v1325, %v1322
          %v1343 = vpack.c.bf16 %v1333, %v1330
          %v1352 = vunpack.c.l.b16 %v1336
          %v1353 = vunpack.c.h.b16 %v1336
          %v1354 = vunpack.c.l.b16 %v1337
          %v1355 = vunpack.c.h.b16 %v1337
          %v1356 = vunpack.c.l.b16 %v1338
          %v1357 = vunpack.c.h.b16 %v1338
          %v1358 = vunpack.c.l.b16 %v1339
          %v1359 = vunpack.c.h.b16 %v1339
          %v1360 = vunpack.c.l.b16 %v1340
          %v1361 = vunpack.c.h.b16 %v1340
          %v1362 = vunpack.c.l.b16 %v1341
          %v1363 = vunpack.c.h.b16 %v1341
          %v1364 = vunpack.c.l.b16 %v1342
          %v1365 = vunpack.c.h.b16 %v1342
          %v1366 = vunpack.c.l.b16 %v1343
          %v1367 = vunpack.c.h.b16 %v1343
          %v1368 = vpack.c.b16 %v1352, %v1352
          %v1369 = vpack.c.b16 %v1353, %v1353
          %v1370 = vpack.c.b16 %v1354, %v1354
          %v1371 = vpack.c.b16 %v1355, %v1355
          %v1372 = vpack.c.b16 %v1356, %v1356
          %v1373 = vpack.c.b16 %v1357, %v1357
          %v1374 = vpack.c.b16 %v1358, %v1358
          %v1375 = vpack.c.b16 %v1359, %v1359
          %v1376 = vpack.c.b16 %v1360, %v1360
          %v1377 = vpack.c.b16 %v1361, %v1361
          %v1378 = vpack.c.b16 %v1362, %v1362
          %v1379 = vpack.c.b16 %v1363, %v1363
          %v1380 = vpack.c.b16 %v1364, %v1364
          %v1381 = vpack.c.b16 %v1365, %v1365
          %v1382 = vpack.c.b16 %v1366, %v1366
          %v1383 = vpack.c.b16 %v1367, %v1367
          %vm1400 = vcmask 257024
          %1401 = vst.msk [vmem:[#allocation2] sm:$0xf] %vm1400, %v1368
          %1402 = vst.msk [vmem:[#allocation2 + $0x4] sm:$0xf] %vm1400, %v1369
          %1403 = vst.msk [vmem:[#allocation2 + $0x8] sm:$0xf] %vm1400, %v1370
          %1404 = vst.msk [vmem:[#allocation2 + $0xc] sm:$0xf] %vm1400, %v1371
          %1405 = vst.msk [vmem:[#allocation2 + $0x10] sm:$0xf] %vm1400, %v1372
          %1406 = vst.msk [vmem:[#allocation2 + $0x14] sm:$0xf] %vm1400, %v1373
          %1407 = vst.msk [vmem:[#allocation2 + $0x18] sm:$0xf] %vm1400, %v1374
          %1408 = vst.msk [vmem:[#allocation2 + $0x1c] sm:$0xf] %vm1400, %v1375
          %1409 = vst.msk [vmem:[#allocation2 + $0x20] sm:$0xf] %vm1400, %v1376
          %1410 = vst.msk [vmem:[#allocation2 + $0x24] sm:$0xf] %vm1400, %v1377
          %1411 = vst.msk [vmem:[#allocation2 + $0x28] sm:$0xf] %vm1400, %v1378
          %1412 = vst.msk [vmem:[#allocation2 + $0x2c] sm:$0xf] %vm1400, %v1379
          %1413 = vst.msk [vmem:[#allocation2 + $0x30] sm:$0xf] %vm1400, %v1380
          %1414 = vst.msk [vmem:[#allocation2 + $0x34] sm:$0xf] %vm1400, %v1381
          %1415 = vst.msk [vmem:[#allocation2 + $0x38] sm:$0xf] %vm1400, %v1382
          %1416 = vst.msk [vmem:[#allocation2 + $0x3c] sm:$0xf] %vm1400, %v1383
        $region102: #{tpu_custom_call.1} parent=85 // pred_fallthru
          _
        %v1417 = vld [vmem:[#allocation2] sm:$0xf]
        %v1418 = vld [vmem:[#allocation2 + $0x4] sm:$0xf]
        %v1419 = vld [vmem:[#allocation2 + $0x8] sm:$0xf]
        %v1420 = vld [vmem:[#allocation2 + $0xc] sm:$0xf]
        %v1421 = vld [vmem:[#allocation2 + $0x10] sm:$0xf]
        %v1422 = vld [vmem:[#allocation2 + $0x14] sm:$0xf]
        %v1423 = vld [vmem:[#allocation2 + $0x18] sm:$0xf]
        %v1424 = vld [vmem:[#allocation2 + $0x1c] sm:$0xf]
        %v1425 = vld [vmem:[#allocation2 + $0x20] sm:$0xf]
        %v1426 = vld [vmem:[#allocation2 + $0x24] sm:$0xf]
        %v1427 = vld [vmem:[#allocation2 + $0x28] sm:$0xf]
        %v1428 = vld [vmem:[#allocation2 + $0x2c] sm:$0xf]
        %v1429 = vld [vmem:[#allocation2 + $0x30] sm:$0xf]
        %v1430 = vld [vmem:[#allocation2 + $0x34] sm:$0xf]
        %v1431 = vld [vmem:[#allocation2 + $0x38] sm:$0xf]
        %v1432 = vld [vmem:[#allocation2 + $0x3c] sm:$0xf]
        %v1433 = vld [vmem:[%s428] sm:$0xff]
        %v1434 = vld [vmem:[%s428 + $0x8] sm:$0xff]
        %v1435 = vld [vmem:[%s428 + $0x10] sm:$0xff]
        %v1436 = vld [vmem:[%s428 + $0x18] sm:$0xff]
        %v1437 = vld [vmem:[%s480] sm:$0x3]
        %v1439 = vlaneseq
        %v1440 = vshrl.u32 %v1439, 7
        %v1441 = vsub.s32 0, %v1440
        %v1442 = vrot.slane %v1437, %v1441
        %v1443 = vlaneseq
        %v1444 = vshrl.u32 %v1443, 7
        %v1445 = vsub.s32 1, %v1444
        %v1446 = vrot.slane %v1437, %v1445
        %v1465 = vunpack.c.l.b16 %v1417
        %v1466 = vunpack.c.l.b16 %v1418
        %v1467 = vunpack.c.l.b16 %v1419
        %v1468 = vunpack.c.l.b16 %v1420
        %v1469 = vunpack.c.l.b16 %v1421
        %v1470 = vunpack.c.l.b16 %v1422
        %v1471 = vunpack.c.l.b16 %v1423
        %v1472 = vunpack.c.l.b16 %v1424
        %v1473 = vunpack.c.l.b16 %v1425
        %v1474 = vunpack.c.l.b16 %v1426
        %v1475 = vunpack.c.l.b16 %v1427
        %v1476 = vunpack.c.l.b16 %v1428
        %v1477 = vunpack.c.l.b16 %v1429
        %v1478 = vunpack.c.l.b16 %v1430
        %v1479 = vunpack.c.l.b16 %v1431
        %v1480 = vunpack.c.l.b16 %v1432
        %v1481 = vpack.c.b16 %v1466, %v1465
        %v1482 = vpack.c.b16 %v1468, %v1467
        %v1483 = vpack.c.b16 %v1470, %v1469
        %v1484 = vpack.c.b16 %v1472, %v1471
        %v1485 = vpack.c.b16 %v1474, %v1473
        %v1486 = vpack.c.b16 %v1476, %v1475
        %v1487 = vpack.c.b16 %v1478, %v1477
        %v1488 = vpack.c.b16 %v1480, %v1479
        %v1493 = vunpack.c.l.b16 %v1433
        %v1494 = vunpack.c.h.b16 %v1433
        %v1495 = vunpack.c.l.b16 %v1434
        %v1496 = vunpack.c.h.b16 %v1434
        %v1497 = vunpack.c.l.b16 %v1435
        %v1498 = vunpack.c.h.b16 %v1435
        %v1499 = vunpack.c.l.b16 %v1436
        %v1500 = vunpack.c.h.b16 %v1436
        %v1501 = vpack.c.b16 %v1495, %v1493
        %v1502 = vpack.c.b16 %v1496, %v1494
        %v1503 = vpack.c.b16 %v1499, %v1497
        %v1504 = vpack.c.b16 %v1500, %v1498
        %vm1509 = vcmask 261120
        %v1511 = vsel %vm1509, %v1481, 0
        %v1514 = vsel %vm1509, %v1482, 0
        %v1517 = vsel %vm1509, %v1483, 0
        %v1520 = vsel %vm1509, %v1484, 0
        %v1523 = vsel %vm1509, %v1485, 0
        %v1526 = vsel %vm1509, %v1486, 0
        %v1529 = vsel %vm1509, %v1487, 0
        %v1532 = vsel %vm1509, %v1488, 0
        %1534 = vmatprep.subr.bf16.mxu0 0
        %1535 = vmatpush1.bf16.msra.mxu0 0
        %1536 = vmatprep.subr.bf16.mxu0 0
        %1537 = vmatpush1.bf16.msra.mxu0 0
        %1538 = vmatprep.subr.bf16.mxu0 0
        %1539 = vmatpush1.bf16.msra.mxu0 0
        %1540 = vmatprep.subr.bf16.mxu0 0
        %1541 = vmatpush1.bf16.msra.mxu0 0
        %1542 = vmatprep.subr.bf16.mxu0 0
        %1543 = vmatpush1.bf16.msra.mxu0 0
        %1544 = vmatprep.subr.bf16.mxu0 0
        %1545 = vmatpush1.bf16.msra.mxu0 0
        %1546 = vmatprep.subr.bf16.mxu0 %v1504
        %1547 = vmatpush1.bf16.msra.mxu0 %v1503
        %1548 = vmatprep.subr.bf16.mxu0 %v1502
        %1549 = vmatpush1.bf16.msra.mxu0 %v1501
        %1550 = vmatprep.subr.bf16.mxu0 0
        %1551 = vmatpush2.bf16.msra.mxu0 0
        %1552 = vmatprep.subr.bf16.mxu0 0
        %1553 = vmatpush2.bf16.msra.mxu0 0
        %1554 = vmatprep.subr.bf16.mxu0 0
        %1555 = vmatpush2.bf16.msra.mxu0 0
        %1556 = vmatprep.subr.bf16.mxu0 0
        %1557 = vmatpush2.bf16.msra.mxu0 0
        %1558 = vmatprep.subr.bf16.mxu0 0
        %1559 = vmatpush2.bf16.msra.mxu0 0
        %1560 = vmatprep.subr.bf16.mxu0 0
        %1561 = vmatpush2.bf16.msra.mxu0 0
        %1562 = vmatprep.subr.bf16.mxu0 0
        %1563 = vmatpush2.bf16.msra.mxu0 0
        %1564 = vmatprep.subr.bf16.mxu0 0
        %1565 = vmatpush2.bf16.msra.mxu0 0
        %1566 = vmatprep.mubr.bf16.mxu0 0
        %1567 = vmatmul.mubr.bf16.gmra.mxu0 %v1511
        %v1568 = vpop.f32.mrf.mxu0
        %v1569 = vadd.f32 %v1442, %v1568
        %v1570 = vpop.f32.mrf.mxu0
        %v1571 = vadd.f32 %v1446, %v1570
        %v1572 = vpop.f32.mrf.mxu0
        %v1573 = vadd.f32 %v1442, %v1572
        %v1574 = vpop.f32.mrf.mxu0
        %v1575 = vadd.f32 %v1446, %v1574
        %1576 = vmatprep.mubr.bf16.mxu0 0
        %1577 = vmatmul.mubr.bf16.gmra.mxu0 %v1514
        %v1578 = vpop.f32.mrf.mxu0
        %v1579 = vadd.f32 %v1442, %v1578
        %v1580 = vpop.f32.mrf.mxu0
        %v1581 = vadd.f32 %v1446, %v1580
        %v1582 = vpop.f32.mrf.mxu0
        %v1583 = vadd.f32 %v1442, %v1582
        %v1584 = vpop.f32.mrf.mxu0
        %v1585 = vadd.f32 %v1446, %v1584
        %1586 = vmatprep.mubr.bf16.mxu0 0
        %1587 = vmatmul.mubr.bf16.gmra.mxu0 %v1517
        %v1588 = vpop.f32.mrf.mxu0
        %v1589 = vadd.f32 %v1442, %v1588
        %v1590 = vpop.f32.mrf.mxu0
        %v1591 = vadd.f32 %v1446, %v1590
        %v1592 = vpop.f32.mrf.mxu0
        %v1593 = vadd.f32 %v1442, %v1592
        %v1594 = vpop.f32.mrf.mxu0
        %v1595 = vadd.f32 %v1446, %v1594
        %1596 = vmatprep.mubr.bf16.mxu0 0
        %1597 = vmatmul.mubr.bf16.gmra.mxu0 %v1520
        %v1598 = vpop.f32.mrf.mxu0
        %v1599 = vadd.f32 %v1442, %v1598
        %v1600 = vpop.f32.mrf.mxu0
        %v1601 = vadd.f32 %v1446, %v1600
        %v1602 = vpop.f32.mrf.mxu0
        %v1603 = vadd.f32 %v1442, %v1602
        %v1604 = vpop.f32.mrf.mxu0
        %v1605 = vadd.f32 %v1446, %v1604
        %1606 = vmatprep.mubr.bf16.mxu0 0
        %1607 = vmatmul.mubr.bf16.gmra.mxu0 %v1523
        %v1608 = vpop.f32.mrf.mxu0
        %v1609 = vadd.f32 %v1442, %v1608
        %v1610 = vpop.f32.mrf.mxu0
        %v1611 = vadd.f32 %v1446, %v1610
        %v1612 = vpop.f32.mrf.mxu0
        %v1613 = vadd.f32 %v1442, %v1612
        %v1614 = vpop.f32.mrf.mxu0
        %v1615 = vadd.f32 %v1446, %v1614
        %1616 = vmatprep.mubr.bf16.mxu0 0
        %1617 = vmatmul.mubr.bf16.gmra.mxu0 %v1526
        %v1618 = vpop.f32.mrf.mxu0
        %v1619 = vadd.f32 %v1442, %v1618
        %v1620 = vpop.f32.mrf.mxu0
        %v1621 = vadd.f32 %v1446, %v1620
        %v1622 = vpop.f32.mrf.mxu0
        %v1623 = vadd.f32 %v1442, %v1622
        %v1624 = vpop.f32.mrf.mxu0
        %v1625 = vadd.f32 %v1446, %v1624
        %1626 = vmatprep.mubr.bf16.mxu0 0
        %1627 = vmatmul.mubr.bf16.gmra.mxu0 %v1529
        %v1628 = vpop.f32.mrf.mxu0
        %v1629 = vadd.f32 %v1442, %v1628
        %v1630 = vpop.f32.mrf.mxu0
        %v1631 = vadd.f32 %v1446, %v1630
        %v1632 = vpop.f32.mrf.mxu0
        %v1633 = vadd.f32 %v1442, %v1632
        %v1634 = vpop.f32.mrf.mxu0
        %v1635 = vadd.f32 %v1446, %v1634
        %1636 = vmatprep.mubr.bf16.mxu0 0
        %1637 = vmatmul.mubr.bf16.gmra.mxu0 %v1532
        %v1638 = vpop.f32.mrf.mxu0
        %v1639 = vadd.f32 %v1442, %v1638
        %v1640 = vpop.f32.mrf.mxu0
        %v1641 = vadd.f32 %v1446, %v1640
        %v1642 = vpop.f32.mrf.mxu0
        %v1643 = vadd.f32 %v1442, %v1642
        %v1644 = vpop.f32.mrf.mxu0
        %v1645 = vadd.f32 %v1446, %v1644
        %1646 = vdwg.mxu0
        %v1647 = vld [vmem:[%s486] sm:$0xff]
        %v1648 = vld [vmem:[%s486 + $0x8] sm:$0xff]
        %v1649 = vld [vmem:[%s486 + $0x10] sm:$0xff]
        %v1650 = vld [vmem:[%s486 + $0x18] sm:$0xff]
        %v1651 = vld [vmem:[%s486 + $0x20] sm:$0xff]
        %v1652 = vld [vmem:[%s486 + $0x28] sm:$0xff]
        %v1653 = vld [vmem:[%s486 + $0x30] sm:$0xff]
        %v1654 = vld [vmem:[%s486 + $0x38] sm:$0xff]
        %v1655 = vld [vmem:[%s486 + $0x40] sm:$0xff]
        %v1656 = vld [vmem:[%s486 + $0x48] sm:$0xff]
        %v1657 = vld [vmem:[%s486 + $0x50] sm:$0xff]
        %v1658 = vld [vmem:[%s486 + $0x58] sm:$0xff]
        %v1659 = vld [vmem:[%s486 + $0x60] sm:$0xff]
        %v1660 = vld [vmem:[%s486 + $0x68] sm:$0xff]
        %v1661 = vld [vmem:[%s486 + $0x70] sm:$0xff]
        %v1662 = vld [vmem:[%s486 + $0x78] sm:$0xff]
        %1664 = vset.pattern.permute.xlu0 0
        %1665 = vperm.xlu0 %1664, %v1647
        %v1666 = vpop.permute.xlu0 %1665
        %1669 = vset.pattern.permute.xlu0 0
        %1670 = vperm.xlu0 %1669, %v1648
        %v1671 = vpop.permute.xlu0 %1670
        %1674 = vset.pattern.permute.xlu0 0
        %1675 = vperm.xlu0 %1674, %v1649
        %v1676 = vpop.permute.xlu0 %1675
        %1679 = vset.pattern.permute.xlu0 0
        %1680 = vperm.xlu0 %1679, %v1650
        %v1681 = vpop.permute.xlu0 %1680
        %1684 = vset.pattern.permute.xlu0 0
        %1685 = vperm.xlu0 %1684, %v1651
        %v1686 = vpop.permute.xlu0 %1685
        %1689 = vset.pattern.permute.xlu0 0
        %1690 = vperm.xlu0 %1689, %v1652
        %v1691 = vpop.permute.xlu0 %1690
        %1694 = vset.pattern.permute.xlu0 0
        %1695 = vperm.xlu0 %1694, %v1653
        %v1696 = vpop.permute.xlu0 %1695
        %1699 = vset.pattern.permute.xlu0 0
        %1700 = vperm.xlu0 %1699, %v1654
        %v1701 = vpop.permute.xlu0 %1700
        %1704 = vset.pattern.permute.xlu0 0
        %1705 = vperm.xlu0 %1704, %v1655
        %v1706 = vpop.permute.xlu0 %1705
        %1709 = vset.pattern.permute.xlu0 0
        %1710 = vperm.xlu0 %1709, %v1656
        %v1711 = vpop.permute.xlu0 %1710
        %1714 = vset.pattern.permute.xlu0 0
        %1715 = vperm.xlu0 %1714, %v1657
        %v1716 = vpop.permute.xlu0 %1715
        %1719 = vset.pattern.permute.xlu0 0
        %1720 = vperm.xlu0 %1719, %v1658
        %v1721 = vpop.permute.xlu0 %1720
        %1724 = vset.pattern.permute.xlu0 0
        %1725 = vperm.xlu0 %1724, %v1659
        %v1726 = vpop.permute.xlu0 %1725
        %1729 = vset.pattern.permute.xlu0 0
        %1730 = vperm.xlu0 %1729, %v1660
        %v1731 = vpop.permute.xlu0 %1730
        %1734 = vset.pattern.permute.xlu0 0
        %1735 = vperm.xlu0 %1734, %v1661
        %v1736 = vpop.permute.xlu0 %1735
        %1739 = vset.pattern.permute.xlu0 0
        %1740 = vperm.xlu0 %1739, %v1662
        %v1741 = vpop.permute.xlu0 %1740
        %v1743 = vmul.f32 %v1666, %v1569
        %v1744 = vmul.f32 %v1671, %v1573
        %v1745 = vmul.f32 %v1676, %v1579
        %v1746 = vmul.f32 %v1681, %v1583
        %v1747 = vmul.f32 %v1686, %v1589
        %v1748 = vmul.f32 %v1691, %v1593
        %v1749 = vmul.f32 %v1696, %v1599
        %v1750 = vmul.f32 %v1701, %v1603
        %v1751 = vmul.f32 %v1706, %v1609
        %v1752 = vmul.f32 %v1711, %v1613
        %v1753 = vmul.f32 %v1716, %v1619
        %v1754 = vmul.f32 %v1721, %v1623
        %v1755 = vmul.f32 %v1726, %v1629
        %v1756 = vmul.f32 %v1731, %v1633
        %v1757 = vmul.f32 %v1736, %v1639
        %v1758 = vmul.f32 %v1741, %v1643
        %1759 = vset.pattern.permute.xlu0 1
        %1760 = vperm.xlu0 %1759, %v1647
        %v1761 = vpop.permute.xlu0 %1760
        %1763 = vset.pattern.permute.xlu0 1
        %1764 = vperm.xlu0 %1763, %v1648
        %v1765 = vpop.permute.xlu0 %1764
        %1767 = vset.pattern.permute.xlu0 1
        %1768 = vperm.xlu0 %1767, %v1649
        %v1769 = vpop.permute.xlu0 %1768
        %1771 = vset.pattern.permute.xlu0 1
        %1772 = vperm.xlu0 %1771, %v1650
        %v1773 = vpop.permute.xlu0 %1772
        %1775 = vset.pattern.permute.xlu0 1
        %1776 = vperm.xlu0 %1775, %v1651
        %v1777 = vpop.permute.xlu0 %1776
        %1779 = vset.pattern.permute.xlu0 1
        %1780 = vperm.xlu0 %1779, %v1652
        %v1781 = vpop.permute.xlu0 %1780
        %1783 = vset.pattern.permute.xlu0 1
        %1784 = vperm.xlu0 %1783, %v1653
        %v1785 = vpop.permute.xlu0 %1784
        %1787 = vset.pattern.permute.xlu0 1
        %1788 = vperm.xlu0 %1787, %v1654
        %v1789 = vpop.permute.xlu0 %1788
        %1791 = vset.pattern.permute.xlu0 1
        %1792 = vperm.xlu0 %1791, %v1655
        %v1793 = vpop.permute.xlu0 %1792
        %1795 = vset.pattern.permute.xlu0 1
        %1796 = vperm.xlu0 %1795, %v1656
        %v1797 = vpop.permute.xlu0 %1796
        %1799 = vset.pattern.permute.xlu0 1
        %1800 = vperm.xlu0 %1799, %v1657
        %v1801 = vpop.permute.xlu0 %1800
        %1803 = vset.pattern.permute.xlu0 1
        %1804 = vperm.xlu0 %1803, %v1658
        %v1805 = vpop.permute.xlu0 %1804
        %1807 = vset.pattern.permute.xlu0 1
        %1808 = vperm.xlu0 %1807, %v1659
        %v1809 = vpop.permute.xlu0 %1808
        %1811 = vset.pattern.permute.xlu0 1
        %1812 = vperm.xlu0 %1811, %v1660
        %v1813 = vpop.permute.xlu0 %1812
        %1815 = vset.pattern.permute.xlu0 1
        %1816 = vperm.xlu0 %1815, %v1661
        %v1817 = vpop.permute.xlu0 %1816
        %1819 = vset.pattern.permute.xlu0 1
        %1820 = vperm.xlu0 %1819, %v1662
        %v1821 = vpop.permute.xlu0 %1820
        %v1823 = vadd.f32 %v1743, %v1761
        %v1824 = vadd.f32 %v1744, %v1765
        %v1825 = vadd.f32 %v1745, %v1769
        %v1826 = vadd.f32 %v1746, %v1773
        %v1827 = vadd.f32 %v1747, %v1777
        %v1828 = vadd.f32 %v1748, %v1781
        %v1829 = vadd.f32 %v1749, %v1785
        %v1830 = vadd.f32 %v1750, %v1789
        %v1831 = vadd.f32 %v1751, %v1793
        %v1832 = vadd.f32 %v1752, %v1797
        %v1833 = vadd.f32 %v1753, %v1801
        %v1834 = vadd.f32 %v1754, %v1805
        %v1835 = vadd.f32 %v1755, %v1809
        %v1836 = vadd.f32 %v1756, %v1813
        %v1837 = vadd.f32 %v1757, %v1817
        %v1838 = vadd.f32 %v1758, %v1821
        %1839 = vset.pattern.permute.xlu0 2
        %1840 = vperm.xlu0 %1839, %v1647
        %v1841 = vpop.permute.xlu0 %1840
        %1843 = vset.pattern.permute.xlu0 2
        %1844 = vperm.xlu0 %1843, %v1648
        %v1845 = vpop.permute.xlu0 %1844
        %1847 = vset.pattern.permute.xlu0 2
        %1848 = vperm.xlu0 %1847, %v1649
        %v1849 = vpop.permute.xlu0 %1848
        %1851 = vset.pattern.permute.xlu0 2
        %1852 = vperm.xlu0 %1851, %v1650
        %v1853 = vpop.permute.xlu0 %1852
        %1855 = vset.pattern.permute.xlu0 2
        %1856 = vperm.xlu0 %1855, %v1651
        %v1857 = vpop.permute.xlu0 %1856
        %1859 = vset.pattern.permute.xlu0 2
        %1860 = vperm.xlu0 %1859, %v1652
        %v1861 = vpop.permute.xlu0 %1860
        %1863 = vset.pattern.permute.xlu0 2
        %1864 = vperm.xlu0 %1863, %v1653
        %v1865 = vpop.permute.xlu0 %1864
        %1867 = vset.pattern.permute.xlu0 2
        %1868 = vperm.xlu0 %1867, %v1654
        %v1869 = vpop.permute.xlu0 %1868
        %1871 = vset.pattern.permute.xlu0 2
        %1872 = vperm.xlu0 %1871, %v1655
        %v1873 = vpop.permute.xlu0 %1872
        %1875 = vset.pattern.permute.xlu0 2
        %1876 = vperm.xlu0 %1875, %v1656
        %v1877 = vpop.permute.xlu0 %1876
        %1879 = vset.pattern.permute.xlu0 2
        %1880 = vperm.xlu0 %1879, %v1657
        %v1881 = vpop.permute.xlu0 %1880
        %1883 = vset.pattern.permute.xlu0 2
        %1884 = vperm.xlu0 %1883, %v1658
        %v1885 = vpop.permute.xlu0 %1884
        %1887 = vset.pattern.permute.xlu0 2
        %1888 = vperm.xlu0 %1887, %v1659
        %v1889 = vpop.permute.xlu0 %1888
        %1891 = vset.pattern.permute.xlu0 2
        %1892 = vperm.xlu0 %1891, %v1660
        %v1893 = vpop.permute.xlu0 %1892
        %1895 = vset.pattern.permute.xlu0 2
        %1896 = vperm.xlu0 %1895, %v1661
        %v1897 = vpop.permute.xlu0 %1896
        %1899 = vset.pattern.permute.xlu0 2
        %1900 = vperm.xlu0 %1899, %v1662
        %v1901 = vpop.permute.xlu0 %1900
        %v1903 = vmul.f32 %v1841, %v1571
        %v1904 = vmul.f32 %v1845, %v1575
        %v1905 = vmul.f32 %v1849, %v1581
        %v1906 = vmul.f32 %v1853, %v1585
        %v1907 = vmul.f32 %v1857, %v1591
        %v1908 = vmul.f32 %v1861, %v1595
        %v1909 = vmul.f32 %v1865, %v1601
        %v1910 = vmul.f32 %v1869, %v1605
        %v1911 = vmul.f32 %v1873, %v1611
        %v1912 = vmul.f32 %v1877, %v1615
        %v1913 = vmul.f32 %v1881, %v1621
        %v1914 = vmul.f32 %v1885, %v1625
        %v1915 = vmul.f32 %v1889, %v1631
        %v1916 = vmul.f32 %v1893, %v1635
        %v1917 = vmul.f32 %v1897, %v1641
        %v1918 = vmul.f32 %v1901, %v1645
        %1919 = vset.pattern.permute.xlu0 3
        %1920 = vperm.xlu0 %1919, %v1647
        %v1921 = vpop.permute.xlu0 %1920
        %1923 = vset.pattern.permute.xlu0 3
        %1924 = vperm.xlu0 %1923, %v1648
        %v1925 = vpop.permute.xlu0 %1924
        %1927 = vset.pattern.permute.xlu0 3
        %1928 = vperm.xlu0 %1927, %v1649
        %v1929 = vpop.permute.xlu0 %1928
        %1931 = vset.pattern.permute.xlu0 3
        %1932 = vperm.xlu0 %1931, %v1650
        %v1933 = vpop.permute.xlu0 %1932
        %1935 = vset.pattern.permute.xlu0 3
        %1936 = vperm.xlu0 %1935, %v1651
        %v1937 = vpop.permute.xlu0 %1936
        %1939 = vset.pattern.permute.xlu0 3
        %1940 = vperm.xlu0 %1939, %v1652
        %v1941 = vpop.permute.xlu0 %1940
        %1943 = vset.pattern.permute.xlu0 3
        %1944 = vperm.xlu0 %1943, %v1653
        %v1945 = vpop.permute.xlu0 %1944
        %1947 = vset.pattern.permute.xlu0 3
        %1948 = vperm.xlu0 %1947, %v1654
        %v1949 = vpop.permute.xlu0 %1948
        %1951 = vset.pattern.permute.xlu0 3
        %1952 = vperm.xlu0 %1951, %v1655
        %v1953 = vpop.permute.xlu0 %1952
        %1955 = vset.pattern.permute.xlu0 3
        %1956 = vperm.xlu0 %1955, %v1656
        %v1957 = vpop.permute.xlu0 %1956
        %1959 = vset.pattern.permute.xlu0 3
        %1960 = vperm.xlu0 %1959, %v1657
        %v1961 = vpop.permute.xlu0 %1960
        %1963 = vset.pattern.permute.xlu0 3
        %1964 = vperm.xlu0 %1963, %v1658
        %v1965 = vpop.permute.xlu0 %1964
        %1967 = vset.pattern.permute.xlu0 3
        %1968 = vperm.xlu0 %1967, %v1659
        %v1969 = vpop.permute.xlu0 %1968
        %1971 = vset.pattern.permute.xlu0 3
        %1972 = vperm.xlu0 %1971, %v1660
        %v1973 = vpop.permute.xlu0 %1972
        %1975 = vset.pattern.permute.xlu0 3
        %1976 = vperm.xlu0 %1975, %v1661
        %v1977 = vpop.permute.xlu0 %1976
        %1979 = vset.pattern.permute.xlu0 3
        %1980 = vperm.xlu0 %1979, %v1662
        %v1981 = vpop.permute.xlu0 %1980
        %v1983 = vadd.f32 %v1903, %v1921
        %v1984 = vadd.f32 %v1904, %v1925
        %v1985 = vadd.f32 %v1905, %v1929
        %v1986 = vadd.f32 %v1906, %v1933
        %v1987 = vadd.f32 %v1907, %v1937
        %v1988 = vadd.f32 %v1908, %v1941
        %v1989 = vadd.f32 %v1909, %v1945
        %v1990 = vadd.f32 %v1910, %v1949
        %v1991 = vadd.f32 %v1911, %v1953
        %v1992 = vadd.f32 %v1912, %v1957
        %v1993 = vadd.f32 %v1913, %v1961
        %v1994 = vadd.f32 %v1914, %v1965
        %v1995 = vadd.f32 %v1915, %v1969
        %v1996 = vadd.f32 %v1916, %v1973
        %v1997 = vadd.f32 %v1917, %v1977
        %v1998 = vadd.f32 %v1918, %v1981
        %v1999 = vmax.f32 %v1823, 0.0
        %v2000 = vmax.f32 %v1824, 0.0
        %v2001 = vmax.f32 %v1825, 0.0
        %v2002 = vmax.f32 %v1826, 0.0
        %v2003 = vmax.f32 %v1827, 0.0
        %v2004 = vmax.f32 %v1828, 0.0
        %v2005 = vmax.f32 %v1829, 0.0
        %v2006 = vmax.f32 %v1830, 0.0
        %v2007 = vmax.f32 %v1831, 0.0
        %v2008 = vmax.f32 %v1832, 0.0
        %v2009 = vmax.f32 %v1833, 0.0
        %v2010 = vmax.f32 %v1834, 0.0
        %v2011 = vmax.f32 %v1835, 0.0
        %v2012 = vmax.f32 %v1836, 0.0
        %v2013 = vmax.f32 %v1837, 0.0
        %v2014 = vmax.f32 %v1838, 0.0
        %v2015 = vand.u32 2147483647, %v1823
        %v2016 = vand.u32 2147483647, %v1824
        %v2017 = vand.u32 2147483647, %v1825
        %v2018 = vand.u32 2147483647, %v1826
        %v2019 = vand.u32 2147483647, %v1827
        %v2020 = vand.u32 2147483647, %v1828
        %v2021 = vand.u32 2147483647, %v1829
        %v2022 = vand.u32 2147483647, %v1830
        %v2023 = vand.u32 2147483647, %v1831
        %v2024 = vand.u32 2147483647, %v1832
        %v2025 = vand.u32 2147483647, %v1833
        %v2026 = vand.u32 2147483647, %v1834
        %v2027 = vand.u32 2147483647, %v1835
        %v2028 = vand.u32 2147483647, %v1836
        %v2029 = vand.u32 2147483647, %v1837
        %v2030 = vand.u32 2147483647, %v1838
        %v2031 = vsub.f32 0.0, %v2015
        %v2032 = vsub.f32 0.0, %v2016
        %v2033 = vsub.f32 0.0, %v2017
        %v2034 = vsub.f32 0.0, %v2018
        %v2035 = vsub.f32 0.0, %v2019
        %v2036 = vsub.f32 0.0, %v2020
        %v2037 = vsub.f32 0.0, %v2021
        %v2038 = vsub.f32 0.0, %v2022
        %v2039 = vsub.f32 0.0, %v2023
        %v2040 = vsub.f32 0.0, %v2024
        %v2041 = vsub.f32 0.0, %v2025
        %v2042 = vsub.f32 0.0, %v2026
        %v2043 = vsub.f32 0.0, %v2027
        %v2044 = vsub.f32 0.0, %v2028
        %v2045 = vsub.f32 0.0, %v2029
        %v2046 = vsub.f32 0.0, %v2030
        %v2047 = vmul.f32 %v2031, 1.442695
        %v2048 = vpow.pop %v2047
        %v2049 = vmul.f32 %v2032, 1.442695
        %v2050 = vpow.pop %v2049
        %v2051 = vmul.f32 %v2033, 1.442695
        %v2052 = vpow.pop %v2051
        %v2053 = vmul.f32 %v2034, 1.442695
        %v2054 = vpow.pop %v2053
        %v2055 = vmul.f32 %v2035, 1.442695
        %v2056 = vpow.pop %v2055
        %v2057 = vmul.f32 %v2036, 1.442695
        %v2058 = vpow.pop %v2057
        %v2059 = vmul.f32 %v2037, 1.442695
        %v2060 = vpow.pop %v2059
        %v2061 = vmul.f32 %v2038, 1.442695
        %v2062 = vpow.pop %v2061
        %v2063 = vmul.f32 %v2039, 1.442695
        %v2064 = vpow.pop %v2063
        %v2065 = vmul.f32 %v2040, 1.442695
        %v2066 = vpow.pop %v2065
        %v2067 = vmul.f32 %v2041, 1.442695
        %v2068 = vpow.pop %v2067
        %v2069 = vmul.f32 %v2042, 1.442695
        %v2070 = vpow.pop %v2069
        %v2071 = vmul.f32 %v2043, 1.442695
        %v2072 = vpow.pop %v2071
        %v2073 = vmul.f32 %v2044, 1.442695
        %v2074 = vpow.pop %v2073
        %v2075 = vmul.f32 %v2045, 1.442695
        %v2076 = vpow.pop %v2075
        %v2077 = vmul.f32 %v2046, 1.442695
        %v2078 = vpow.pop %v2077
        %v2079 = vadd.f32 %v2048, 1.0
        %v2080 = vlog2.pop %v2079
        %v2081 = vmul.f32 %v2080, 0.6931472
        %v2082 = vmul.f32 -0.5, %v2048
        %v2083 = vadd.f32 %v2082, 1.0
        %v2084 = vmul.f32 %v2083, %v2048
        %v2085 = vand.u32 2147483647, %v2048
        %vm2086 = vcmp.lt.f32.partialorder %v2085, 0.0004427343
        %v2087 = vsel %vm2086, %v2084, %v2081
        %v2088 = vadd.f32 %v2050, 1.0
        %v2089 = vlog2.pop %v2088
        %v2090 = vmul.f32 %v2089, 0.6931472
        %v2091 = vmul.f32 -0.5, %v2050
        %v2092 = vadd.f32 %v2091, 1.0
        %v2093 = vmul.f32 %v2092, %v2050
        %v2094 = vand.u32 2147483647, %v2050
        %vm2095 = vcmp.lt.f32.partialorder %v2094, 0.0004427343
        %v2096 = vsel %vm2095, %v2093, %v2090
        %v2097 = vadd.f32 %v2052, 1.0
        %v2098 = vlog2.pop %v2097
        %v2099 = vmul.f32 %v2098, 0.6931472
        %v2100 = vmul.f32 -0.5, %v2052
        %v2101 = vadd.f32 %v2100, 1.0
        %v2102 = vmul.f32 %v2101, %v2052
        %v2103 = vand.u32 2147483647, %v2052
        %vm2104 = vcmp.lt.f32.partialorder %v2103, 0.0004427343
        %v2105 = vsel %vm2104, %v2102, %v2099
        %v2106 = vadd.f32 %v2054, 1.0
        %v2107 = vlog2.pop %v2106
        %v2108 = vmul.f32 %v2107, 0.6931472
        %v2109 = vmul.f32 -0.5, %v2054
        %v2110 = vadd.f32 %v2109, 1.0
        %v2111 = vmul.f32 %v2110, %v2054
        %v2112 = vand.u32 2147483647, %v2054
        %vm2113 = vcmp.lt.f32.partialorder %v2112, 0.0004427343
        %v2114 = vsel %vm2113, %v2111, %v2108
        %v2115 = vadd.f32 %v2056, 1.0
        %v2116 = vlog2.pop %v2115
        %v2117 = vmul.f32 %v2116, 0.6931472
        %v2118 = vmul.f32 -0.5, %v2056
        %v2119 = vadd.f32 %v2118, 1.0
        %v2120 = vmul.f32 %v2119, %v2056
        %v2121 = vand.u32 2147483647, %v2056
        %vm2122 = vcmp.lt.f32.partialorder %v2121, 0.0004427343
        %v2123 = vsel %vm2122, %v2120, %v2117
        %v2124 = vadd.f32 %v2058, 1.0
        %v2125 = vlog2.pop %v2124
        %v2126 = vmul.f32 %v2125, 0.6931472
        %v2127 = vmul.f32 -0.5, %v2058
        %v2128 = vadd.f32 %v2127, 1.0
        %v2129 = vmul.f32 %v2128, %v2058
        %v2130 = vand.u32 2147483647, %v2058
        %vm2131 = vcmp.lt.f32.partialorder %v2130, 0.0004427343
        %v2132 = vsel %vm2131, %v2129, %v2126
        %v2133 = vadd.f32 %v2060, 1.0
        %v2134 = vlog2.pop %v2133
        %v2135 = vmul.f32 %v2134, 0.6931472
        %v2136 = vmul.f32 -0.5, %v2060
        %v2137 = vadd.f32 %v2136, 1.0
        %v2138 = vmul.f32 %v2137, %v2060
        %v2139 = vand.u32 2147483647, %v2060
        %vm2140 = vcmp.lt.f32.partialorder %v2139, 0.0004427343
        %v2141 = vsel %vm2140, %v2138, %v2135
        %v2142 = vadd.f32 %v2062, 1.0
        %v2143 = vlog2.pop %v2142
        %v2144 = vmul.f32 %v2143, 0.6931472
        %v2145 = vmul.f32 -0.5, %v2062
        %v2146 = vadd.f32 %v2145, 1.0
        %v2147 = vmul.f32 %v2146, %v2062
        %v2148 = vand.u32 2147483647, %v2062
        %vm2149 = vcmp.lt.f32.partialorder %v2148, 0.0004427343
        %v2150 = vsel %vm2149, %v2147, %v2144
        %v2151 = vadd.f32 %v2064, 1.0
        %v2152 = vlog2.pop %v2151
        %v2153 = vmul.f32 %v2152, 0.6931472
        %v2154 = vmul.f32 -0.5, %v2064
        %v2155 = vadd.f32 %v2154, 1.0
        %v2156 = vmul.f32 %v2155, %v2064
        %v2157 = vand.u32 2147483647, %v2064
        %vm2158 = vcmp.lt.f32.partialorder %v2157, 0.0004427343
        %v2159 = vsel %vm2158, %v2156, %v2153
        %v2160 = vadd.f32 %v2066, 1.0
        %v2161 = vlog2.pop %v2160
        %v2162 = vmul.f32 %v2161, 0.6931472
        %v2163 = vmul.f32 -0.5, %v2066
        %v2164 = vadd.f32 %v2163, 1.0
        %v2165 = vmul.f32 %v2164, %v2066
        %v2166 = vand.u32 2147483647, %v2066
        %vm2167 = vcmp.lt.f32.partialorder %v2166, 0.0004427343
        %v2168 = vsel %vm2167, %v2165, %v2162
        %v2169 = vadd.f32 %v2068, 1.0
        %v2170 = vlog2.pop %v2169
        %v2171 = vmul.f32 %v2170, 0.6931472
        %v2172 = vmul.f32 -0.5, %v2068
        %v2173 = vadd.f32 %v2172, 1.0
        %v2174 = vmul.f32 %v2173, %v2068
        %v2175 = vand.u32 2147483647, %v2068
        %vm2176 = vcmp.lt.f32.partialorder %v2175, 0.0004427343
        %v2177 = vsel %vm2176, %v2174, %v2171
        %v2178 = vadd.f32 %v2070, 1.0
        %v2179 = vlog2.pop %v2178
        %v2180 = vmul.f32 %v2179, 0.6931472
        %v2181 = vmul.f32 -0.5, %v2070
        %v2182 = vadd.f32 %v2181, 1.0
        %v2183 = vmul.f32 %v2182, %v2070
        %v2184 = vand.u32 2147483647, %v2070
        %vm2185 = vcmp.lt.f32.partialorder %v2184, 0.0004427343
        %v2186 = vsel %vm2185, %v2183, %v2180
        %v2187 = vadd.f32 %v2072, 1.0
        %v2188 = vlog2.pop %v2187
        %v2189 = vmul.f32 %v2188, 0.6931472
        %v2190 = vmul.f32 -0.5, %v2072
        %v2191 = vadd.f32 %v2190, 1.0
        %v2192 = vmul.f32 %v2191, %v2072
        %v2193 = vand.u32 2147483647, %v2072
        %vm2194 = vcmp.lt.f32.partialorder %v2193, 0.0004427343
        %v2195 = vsel %vm2194, %v2192, %v2189
        %v2196 = vadd.f32 %v2074, 1.0
        %v2197 = vlog2.pop %v2196
        %v2198 = vmul.f32 %v2197, 0.6931472
        %v2199 = vmul.f32 -0.5, %v2074
        %v2200 = vadd.f32 %v2199, 1.0
        %v2201 = vmul.f32 %v2200, %v2074
        %v2202 = vand.u32 2147483647, %v2074
        %vm2203 = vcmp.lt.f32.partialorder %v2202, 0.0004427343
        %v2204 = vsel %vm2203, %v2201, %v2198
        %v2205 = vadd.f32 %v2076, 1.0
        %v2206 = vlog2.pop %v2205
        %v2207 = vmul.f32 %v2206, 0.6931472
        %v2208 = vmul.f32 -0.5, %v2076
        %v2209 = vadd.f32 %v2208, 1.0
        %v2210 = vmul.f32 %v2209, %v2076
        %v2211 = vand.u32 2147483647, %v2076
        %vm2212 = vcmp.lt.f32.partialorder %v2211, 0.0004427343
        %v2213 = vsel %vm2212, %v2210, %v2207
        %v2214 = vadd.f32 %v2078, 1.0
        %v2215 = vlog2.pop %v2214
        %v2216 = vmul.f32 %v2215, 0.6931472
        %v2217 = vmul.f32 -0.5, %v2078
        %v2218 = vadd.f32 %v2217, 1.0
        %v2219 = vmul.f32 %v2218, %v2078
        %v2220 = vand.u32 2147483647, %v2078
        %vm2221 = vcmp.lt.f32.partialorder %v2220, 0.0004427343
        %v2222 = vsel %vm2221, %v2219, %v2216
        %v2223 = vadd.f32 %v1999, %v2087
        %v2224 = vadd.f32 %v2000, %v2096
        %v2225 = vadd.f32 %v2001, %v2105
        %v2226 = vadd.f32 %v2002, %v2114
        %v2227 = vadd.f32 %v2003, %v2123
        %v2228 = vadd.f32 %v2004, %v2132
        %v2229 = vadd.f32 %v2005, %v2141
        %v2230 = vadd.f32 %v2006, %v2150
        %v2231 = vadd.f32 %v2007, %v2159
        %v2232 = vadd.f32 %v2008, %v2168
        %v2233 = vadd.f32 %v2009, %v2177
        %v2234 = vadd.f32 %v2010, %v2186
        %v2235 = vadd.f32 %v2011, %v2195
        %v2236 = vadd.f32 %v2012, %v2204
        %v2237 = vadd.f32 %v2013, %v2213
        %v2238 = vadd.f32 %v2014, %v2222
        %2239 = vst [vmem:[%s467] sm:$0xff] %v2223
        %2240 = vst [vmem:[%s467 + $0x8] sm:$0xff] %v2224
        %2241 = vst [vmem:[%s467 + $0x10] sm:$0xff] %v2225
        %2242 = vst [vmem:[%s467 + $0x18] sm:$0xff] %v2226
        %2243 = vst [vmem:[%s467 + $0x20] sm:$0xff] %v2227
        %2244 = vst [vmem:[%s467 + $0x28] sm:$0xff] %v2228
        %2245 = vst [vmem:[%s467 + $0x30] sm:$0xff] %v2229
        %2246 = vst [vmem:[%s467 + $0x38] sm:$0xff] %v2230
        %2247 = vst [vmem:[%s467 + $0x40] sm:$0xff] %v2231
        %2248 = vst [vmem:[%s467 + $0x48] sm:$0xff] %v2232
        %2249 = vst [vmem:[%s467 + $0x50] sm:$0xff] %v2233
        %2250 = vst [vmem:[%s467 + $0x58] sm:$0xff] %v2234
        %2251 = vst [vmem:[%s467 + $0x60] sm:$0xff] %v2235
        %2252 = vst [vmem:[%s467 + $0x68] sm:$0xff] %v2236
        %2253 = vst [vmem:[%s467 + $0x70] sm:$0xff] %v2237
        %2254 = vst [vmem:[%s467 + $0x78] sm:$0xff] %v2238
        %2255 = vst [vmem:[%s474] sm:$0xff] %v1983
        %2256 = vst [vmem:[%s474 + $0x8] sm:$0xff] %v1984
        %2257 = vst [vmem:[%s474 + $0x10] sm:$0xff] %v1985
        %2258 = vst [vmem:[%s474 + $0x18] sm:$0xff] %v1986
        %2259 = vst [vmem:[%s474 + $0x20] sm:$0xff] %v1987
        %2260 = vst [vmem:[%s474 + $0x28] sm:$0xff] %v1988
        %2261 = vst [vmem:[%s474 + $0x30] sm:$0xff] %v1989
        %2262 = vst [vmem:[%s474 + $0x38] sm:$0xff] %v1990
        %2263 = vst [vmem:[%s474 + $0x40] sm:$0xff] %v1991
        %2264 = vst [vmem:[%s474 + $0x48] sm:$0xff] %v1992
        %2265 = vst [vmem:[%s474 + $0x50] sm:$0xff] %v1993
        %2266 = vst [vmem:[%s474 + $0x58] sm:$0xff] %v1994
        %2267 = vst [vmem:[%s474 + $0x60] sm:$0xff] %v1995
        %2268 = vst [vmem:[%s474 + $0x68] sm:$0xff] %v1996
        %2269 = vst [vmem:[%s474 + $0x70] sm:$0xff] %v1997
        %2270 = vst [vmem:[%s474 + $0x78] sm:$0xff] %v1998
        %s2271 = sand.u32 %s239, 1
        %s2272 = scalar_lea.sflag [#allocation5], %s2271
        %s2273 = sand.u32 %s239, 1
        %s2274 = smul.addr %s2273, 128
        %s2275 = scalar_lea.vmem [#allocation9], %s2274
        %s2276 = sand.u32 %s267, 1
        %s2277 = scalar_lea.sflag [#allocation11], %s2276
        %s2278 = sand.u32 %s267, 1
        %s2279 = smul.addr %s2278, 128
        %s2280 = scalar_lea.vmem [#allocation10], %s2279
        // Predicated region
        $region103: #{tpu_custom_call.1} parent=85 // pred_check
          %p2281 = pneg %p249
        $region104: #{tpu_custom_call.1} parent=85 // pred_check_branch
          %2283 = sbr.rel (%p2281) target = $region106
        $region105: #{tpu_custom_call.1} parent=85 // pred_region
          %s2284 = smul.u32 16, %s33
          %s2286 = ssub.s32 2048, 2048
          %2287 = vsyncadd %s2272, %s2286
          %s2288 = smul.addr %s2284, 2
          %s2289 = sadd.s32 %s34, %s2288
          %s2290 = smul.addr %s2289, 128
          %s2291 = scalar_lea.hbm %s8, %s2290
          %s2292 = sshll.u32 %s2275, 4
          %s2293 = int_to_ptr.vmem [resolvable:$true] %s2292
          %2298 = dma.vmem_to_hbm [thread:$0]  %s2293, 2048, %s2291, %s2272, 128, 256, 8
        $region106: #{tpu_custom_call.1} parent=85 // pred_fallthru
          _
        // Predicated region
        $region107: #{tpu_custom_call.1} parent=85 // pred_check
          %p2299 = pneg %p277
        $region108: #{tpu_custom_call.1} parent=85 // pred_check_branch
          %2301 = sbr.rel (%p2299) target = $region110
        $region109: #{tpu_custom_call.1} parent=85 // pred_region
          %s2302 = smul.u32 16, %s33
          %s2304 = ssub.s32 2048, 2048
          %2305 = vsyncadd %s2277, %s2304
          %s2306 = smul.addr %s2302, 2
          %s2307 = sadd.s32 %s34, %s2306
          %s2308 = smul.addr %s2307, 128
          %s2309 = scalar_lea.hbm %s9, %s2308
          %s2310 = sshll.u32 %s2280, 4
          %s2311 = int_to_ptr.vmem [resolvable:$true] %s2310
          %2316 = dma.vmem_to_hbm [thread:$0]  %s2311, 2048, %s2309, %s2277, 128, 256, 8
        $region110: #{tpu_custom_call.1} parent=85 // pred_fallthru
          _
      $region86: #{tpu_custom_call.1} parent=5 // pred_fallthru
        _
      %p2317 = scmp.le.s32.totalorder 2, %s24
      // Predicated region
      $region111: #{tpu_custom_call.1} parent=5 // pred_check
        %p2318 = pneg %p2317
      $region112: #{tpu_custom_call.1} parent=5 // pred_check_branch
        %2320 = sbr.rel (%p2318) target = $region114
      $region113: #{tpu_custom_call.1} parent=5 // pred_region
        %s2321 = ssub.s32 %s24, 2
        // Predicated region
        $region115: #{tpu_custom_call.1} parent=113 // pred_check
          %p2322 = pneg %p255
        $region116: #{tpu_custom_call.1} parent=113 // pred_check_branch
          %2324 = sbr.rel (%p2322) target = $region118
        $region117: #{tpu_custom_call.1} parent=113 // pred_region
          %s2325 = sand.u32 %s240, 1
          %s2326 = scalar_lea.sflag [#allocation5], %s2325
          %s2327 = sand.u32 %s240, 1
          %s2328 = smul.addr %s2327, 128
          %s2329 = scalar_lea.vmem [#allocation9], %s2328
          %2330 = dma.done %s2326, 2048
        $region118: #{tpu_custom_call.1} parent=113 // pred_fallthru
          _
        // Predicated region
        $region119: #{tpu_custom_call.1} parent=113 // pred_check
          %p2331 = pneg %p283
        $region120: #{tpu_custom_call.1} parent=113 // pred_check_branch
          %2333 = sbr.rel (%p2331) target = $region122
        $region121: #{tpu_custom_call.1} parent=113 // pred_region
          %s2334 = sand.u32 %s268, 1
          %s2335 = scalar_lea.sflag [#allocation11], %s2334
          %s2336 = sand.u32 %s268, 1
          %s2337 = smul.addr %s2336, 128
          %s2338 = scalar_lea.vmem [#allocation10], %s2337
          %2339 = dma.done %s2335, 2048
        $region122: #{tpu_custom_call.1} parent=113 // pred_fallthru
          _
      $region114: #{tpu_custom_call.1} parent=5 // pred_fallthru
        _
    $region6: #{tpu_custom_call.1} parent=1 // loop_footer
      %s28 = sadd.s32 1, %s24
    $region7: #{tpu_custom_call.1} parent=1 // loop_footer_branch
      %23 = sbr.rel target = $region3
    $region8: #{tpu_custom_call.1} parent=1 // loop_exit
      _
    %2340 = vsyncpa [#allocation4], 1
    %s2341 = scalar_lea.sflag [#allocation4], 1
    %2342 = vsyncpa %s2341, 1
    %2343 = vsyncpa [#allocation7], 1
    %2344 = vsyncpa [#allocation5], 1
    %s2345 = scalar_lea.sflag [#allocation5], 1
    %2346 = vsyncpa %s2345, 1
    %2347 = vsyncpa [#allocation11], 1
    %s2348 = scalar_lea.sflag [#allocation11], 1
    %2349 = vsyncpa %s2348, 1

</llo_original>
